<compile_context>
chip_gen: v5e
topology: v5e:2x2
jax: 0.10.0
libtpu: 0.0.40
codegen_flags: <defaults>
</compile_context>

<pallas_src>
import functools
import math

import jax
import jax.numpy as jnp
from jax import lax
from jax.experimental import pallas as pl
from jax.experimental.pallas import tpu as pltpu


# --------------------------------------------------------------------------
# Phase 1: depthwise conv + pointwise 1x1 conv (MXU) + partial BN statistics.
# Grid: (N,)  -- one image per grid step, pipelined / megacore-parallel.
# --------------------------------------------------------------------------
def _dw_pw_stats_kernel(xp_ref, wdw_ref, wpw_ref, y_ref, stats_ref, *, K, stride):
    # xp_ref   : (1, Hp, Wp, Cp)  spatially pre-padded input tile (one image)
    # wdw_ref  : (K*K, Cp)        depthwise taps (channel-padded)
    # wpw_ref  : (Cp, Cp)         pointwise weight, (C_in, C_out), zero-padded
    # y_ref    : (1, Ho, Wo, Cp)  pre-BN activations (intermediate, lane-dense)
    # stats_ref: (1, 2, Cp)       per-image [sum, sum_sq] over (Ho*Wo) rows
    x0 = xp_ref[0]                      # (Hp, Wp, Cp), f32
    wdw = wdw_ref[...]                  # (K*K, Cp)
    wpw = wpw_ref[...]                  # (Cp, Cp)

    Hp, Wp, Cp = x0.shape
    Ho = (Hp - K) // stride + 1
    Wo = (Wp - K) // stride + 1

    # Depthwise conv (groups == channels): K*K shifted taps on the VPU.
    # TODO(synk): for stride > 1, decimate rows via the BlockSpec index_map
    # instead of strided in-kernel slices (sublane-strided reads relayout).
    acc = jnp.zeros((Ho, Wo, Cp), jnp.float32)
    for dy in range(K):
        for dx in range(K):
            patch = x0[dy:dy + (Ho - 1) * stride + 1:stride,
                       dx:dx + (Wo - 1) * stride + 1:stride, :]
            acc = acc + patch * wdw[dy * K + dx][None, None, :]

    # Pointwise 1x1 conv == lane-dense channel matmul on the MXU.
    flat = acc.reshape(Ho * Wo, Cp)                      # (M, Cp), M = Ho*Wo
    y = jnp.dot(flat, wpw, preferred_element_type=jnp.float32)

    # Partial BN statistics (exact f32 reduction; summed across N in wrapper).
    sum_c = jnp.sum(y, axis=0, keepdims=True)            # (1, Cp)
    sumsq_c = jnp.sum(y * y, axis=0, keepdims=True)      # (1, Cp)

    y_ref[...] = y.reshape(1, Ho, Wo, Cp).astype(y_ref.dtype)
    stats_ref[...] = jnp.concatenate([sum_c, sumsq_c], axis=0).reshape(1, 2, Cp)


# --------------------------------------------------------------------------
# Phase 2: folded BatchNorm affine (y*scale + shift) + Hardswish. Grid: (N,)
# --------------------------------------------------------------------------
def _bn_hswish_kernel(y_ref, ss_ref, o_ref):
    # y_ref : (1, Ho, Wo, Cp)
    # ss_ref: (2, Cp)   row 0 = scale = gamma*rsqrt(var+eps), row 1 = shift
    y = y_ref[...]
    scale = ss_ref[0:1, :]              # (1, Cp) -> broadcasts over (Wo, Cp)
    shift = ss_ref[1:2, :]
    z = y * scale + shift
    # Hardswish: x * relu6(x + 3) / 6
    o_ref[...] = (z * jnp.clip(z + 3.0, 0.0, 6.0) * (1.0 / 6.0)).astype(o_ref.dtype)


def dwconv2d_bn(x_nchw, w_dw, w_pw, gamma, beta, *, kernel_size, stride=1,
                eps=1e-5):
    """DWConv2d_BN forward.

    x_nchw: (N, C, H, W); w_dw: (K, K, C) depthwise taps; w_pw: (C_in, C_out)
    pointwise weight; gamma/beta: (C,) BN affine. Returns NCHW.
    """
    N, C, H, W = x_nchw.shape
    K = kernel_size
    p = (K - 1) // 2
    Hp, Wp = H + 2 * p, W + 2 * p
    Ho = (Hp - K) // stride + 1
    Wo = (Wp - K) // stride + 1
    Cp = ((C + 127) // 128) * 128       # lane-dense padded channel count

    # Layout glue (wrapper-side XLA): NCHW -> NHWC, spatial zero-pad for the
    # conv, channel zero-pad for lane density. All small compared to the
    # kernel's own traffic at these shapes.
    x = jnp.transpose(x_nchw, (0, 2, 3, 1)).astype(jnp.float32)
    xp = jnp.pad(x, ((0, 0), (p, p), (p, p), (0, Cp - C)))

    wdw = jnp.pad(w_dw.astype(jnp.float32),
                  ((0, 0), (0, 0), (0, Cp - C))).reshape(K * K, Cp)
    wpw = jnp.pad(w_pw.astype(jnp.float32), ((0, Cp - C), (0, Cp - C)))
    gamma_p = jnp.pad(gamma.astype(jnp.float32), (0, Cp - C))
    beta_p = jnp.pad(beta.astype(jnp.float32), (0, Cp - C))

    cparams = pltpu.CompilerParams(
        dimension_semantics=("parallel",),        # shard batch across TCs (v7x)
        vmem_limit_bytes=64 * 1024 * 1024,
    )

    # ---- phase 1: conv + partial stats ------------------------------------
    # TODO(synk): for very large H*W a per-image block no longer fits VMEM;
    # that case needs a row-tiled grid with halo DMA (pl.ANY + make_async_copy).
    y, stats = pl.pallas_call(
        functools.partial(_dw_pw_stats_kernel, K=K, stride=stride),
        grid=(N,),
        in_specs=[
            pl.BlockSpec((1, Hp, Wp, Cp), lambda n: (n, 0, 0, 0)),
            pl.BlockSpec((K * K, Cp), lambda n: (0, 0)),
            pl.BlockSpec((Cp, Cp), lambda n: (0, 0)),
        ],
        out_specs=[
            pl.BlockSpec((1, Ho, Wo, Cp), lambda n: (n, 0, 0, 0)),
            pl.BlockSpec((1, 2, Cp), lambda n: (n, 0, 0)),
        ],
        out_shape=[
            jax.ShapeDtypeStruct((N, Ho, Wo, Cp), jnp.float32),
            jax.ShapeDtypeStruct((N, 2, Cp), jnp.float32),
        ],
        compiler_params=cparams,
    )(xp, wdw, wpw)

    # ---- global BN statistics -> folded scale / shift (tiny, C-sized) -----
    count = float(N * Ho * Wo)
    sums = jnp.sum(stats, axis=0)                         # (2, Cp)
    mean = sums[0] / count
    var = jnp.maximum(sums[1] / count - mean * mean, 0.0)  # biased (training BN)
    scale = gamma_p * lax.rsqrt(var + eps)
    shift = beta_p - mean * scale
    ss = jnp.stack([scale, shift], axis=0)                # (2, Cp)

    # ---- phase 2: normalize + Hardswish ------------------------------------
    out_p = pl.pallas_call(
        _bn_hswish_kernel,
        grid=(N,),
        in_specs=[
            pl.BlockSpec((1, Ho, Wo, Cp), lambda n: (n, 0, 0, 0)),
            pl.BlockSpec((2, Cp), lambda n: (0, 0)),
        ],
        out_specs=pl.BlockSpec((1, Ho, Wo, Cp), lambda n: (n, 0, 0, 0)),
        out_shape=jax.ShapeDtypeStruct((N, Ho, Wo, Cp), jnp.float32),
        compiler_params=cparams,
    )(y, ss)

    # Drop channel padding, back to NCHW to match the PyTorch module.
    return jnp.transpose(out_p[..., :C], (0, 3, 1, 2))


def _reference(x_nchw, w_dw, w_pw, gamma, beta, *, kernel_size, stride, eps):
    """Pure-JAX reference matching the PyTorch forward (training-mode BN)."""
    C = x_nchw.shape[1]
    K = kernel_size
    p = (K - 1) // 2
    # depthwise: PyTorch weight layout (C, 1, K, K)
    wd = jnp.transpose(w_dw, (2, 0, 1))[:, None, :, :]
    y = lax.conv_general_dilated(x_nchw, wd, (stride, stride),
                                 [(p, p), (p, p)], feature_group_count=C)
    # pointwise: PyTorch weight layout (C_out, C_in, 1, 1)
    wp = jnp.transpose(w_pw, (1, 0))[:, :, None, None]
    y = lax.conv_general_dilated(y, wp, (1, 1), [(0, 0), (0, 0)])
    mean = jnp.mean(y, axis=(0, 2, 3), keepdims=True)
    var = jnp.mean(jnp.square(y - mean), axis=(0, 2, 3), keepdims=True)
    y = (y - mean) * lax.rsqrt(var + eps)
    y = y * gamma[None, :, None, None] + beta[None, :, None, None]
    return y * jnp.clip(y + 3.0, 0.0, 6.0) / 6.0


if __name__ == "__main__":
    # Small shapes consistent with the module: depthwise (groups=out_ch)
    # implies in_ch == out_ch.
    N, C, H, W = 2, 8, 16, 16
    K, stride = 3, 1
    bn_weight_init = 1.0
    eps = 1e-5

    key = jax.random.PRNGKey(0)
    kx, kdw, kpw = jax.random.split(key, 3)

    x = jax.random.normal(kx, (N, C, H, W), dtype=jnp.float32)

    # Conv weight init: normal(0, sqrt(2 / (k*k*out_ch))), bias-free convs.
    std_dw = math.sqrt(2.0 / (K * K * C))
    std_pw = math.sqrt(2.0 / (1 * 1 * C))
    w_dw = std_dw * jax.random.normal(kdw, (K, K, C), dtype=jnp.float32)
    w_pw = std_pw * jax.random.normal(kpw, (C, C), dtype=jnp.float32)  # (in, out)

    # BN params: weight filled with bn_weight_init, bias zero.
    gamma = jnp.full((C,), bn_weight_init, dtype=jnp.float32)
    beta = jnp.zeros((C,), dtype=jnp.float32)

    out = dwconv2d_bn(x, w_dw, w_pw, gamma, beta,
                      kernel_size=K, stride=stride, eps=eps)
    out = jax.block_until_ready(out)

    ref = _reference(x, w_dw, w_pw, gamma, beta,
                     kernel_size=K, stride=stride, eps=eps)
    assert out.shape == (N, C, H, W)
    assert jnp.allclose(out, ref, rtol=2e-4, atol=2e-4), (
        float(jnp.max(jnp.abs(out - ref))))

    print("KERNEL_OK")
</pallas_src>

<mosaic_0001>
module attributes {stable_mosaic.version = 11 : i64} {
  func.func @_dw_pw_stats_kernel(%arg0: i32, %arg1: memref<1x18x18x128xf32, #tpu.memory_space<vmem>>, %arg2: memref<9x128xf32, #tpu.memory_space<vmem>>, %arg3: memref<128x128xf32, #tpu.memory_space<vmem>>, %arg4: memref<1x16x16x128xf32, #tpu.memory_space<vmem>>, %arg5: memref<1x2x128xf32, #tpu.memory_space<vmem>>) attributes {dimension_semantics = [#tpu.dimension_semantics<parallel>], iteration_bounds = array<i64: 2>, scalar_prefetch = 0 : i64, scratch_operands = 0 : i64, tpu.core_type = #tpu.core_type<tc>, window_params = [{transform_indices = @transform_0, window_bounds = array<i64: 1, 18, 18, 128>}, {pipeline_mode = #tpu.pipeline_mode<synchronous>, transform_indices = @transform_1, window_bounds = array<i64: 9, 128>}, {pipeline_mode = #tpu.pipeline_mode<synchronous>, transform_indices = @transform_2, window_bounds = array<i64: 128, 128>}, {transform_indices = @transform_3, window_bounds = array<i64: 1, 16, 16, 128>}, {transform_indices = @transform_4, window_bounds = array<i64: 1, 2, 128>}]} {
    %c0 = arith.constant 0 : index
    %c0_0 = arith.constant 0 : index
    %c0_1 = arith.constant 0 : index
    %c0_2 = arith.constant 0 : index
    %0 = vector.load %arg1[%c0, %c0_0, %c0_1, %c0_2] : memref<1x18x18x128xf32, #tpu.memory_space<vmem>>, vector<1x18x18x128xf32>
    %1 = vector.shape_cast %0 : vector<1x18x18x128xf32> to vector<18x18x128xf32>
    %c0_3 = arith.constant 0 : index
    %c0_4 = arith.constant 0 : index
    %2 = vector.load %arg2[%c0_3, %c0_4] : memref<9x128xf32, #tpu.memory_space<vmem>>, vector<9x128xf32>
    %c0_5 = arith.constant 0 : index
    %c0_6 = arith.constant 0 : index
    %3 = vector.load %arg3[%c0_5, %c0_6] : memref<128x128xf32, #tpu.memory_space<vmem>>, vector<128x128xf32>
    %cst = arith.constant 0.000000e+00 : f32
    %4 = vector.broadcast %cst : f32 to vector<16x16x128xf32>
    %5 = vector.extract_strided_slice %1 {offsets = [0, 0, 0], sizes = [16, 16, 128], strides = [1, 1, 1]} : vector<18x18x128xf32> to vector<16x16x128xf32>
    %6 = vector.extract_strided_slice %2 {offsets = [0, 0], sizes = [1, 128], strides = [1, 1]} : vector<9x128xf32> to vector<1x128xf32>
    %7 = vector.shape_cast %6 : vector<1x128xf32> to vector<128xf32>
    %8 = vector.shape_cast %7 : vector<128xf32> to vector<1x1x128xf32>
    %9 = vector.broadcast %8 : vector<1x1x128xf32> to vector<16x16x128xf32>
    %10 = arith.mulf %5, %9 : vector<16x16x128xf32>
    %11 = arith.addf %4, %10 : vector<16x16x128xf32>
    %12 = vector.extract_strided_slice %1 {offsets = [0, 1, 0], sizes = [16, 16, 128], strides = [1, 1, 1]} : vector<18x18x128xf32> to vector<16x16x128xf32>
    %13 = vector.extract_strided_slice %2 {offsets = [1, 0], sizes = [1, 128], strides = [1, 1]} : vector<9x128xf32> to vector<1x128xf32>
    %14 = vector.shape_cast %13 : vector<1x128xf32> to vector<128xf32>
    %15 = vector.shape_cast %14 : vector<128xf32> to vector<1x1x128xf32>
    %16 = vector.broadcast %15 : vector<1x1x128xf32> to vector<16x16x128xf32>
    %17 = arith.mulf %12, %16 : vector<16x16x128xf32>
    %18 = arith.addf %11, %17 : vector<16x16x128xf32>
    %19 = vector.extract_strided_slice %1 {offsets = [0, 2, 0], sizes = [16, 16, 128], strides = [1, 1, 1]} : vector<18x18x128xf32> to vector<16x16x128xf32>
    %20 = vector.extract_strided_slice %2 {offsets = [2, 0], sizes = [1, 128], strides = [1, 1]} : vector<9x128xf32> to vector<1x128xf32>
    %21 = vector.shape_cast %20 : vector<1x128xf32> to vector<128xf32>
    %22 = vector.shape_cast %21 : vector<128xf32> to vector<1x1x128xf32>
    %23 = vector.broadcast %22 : vector<1x1x128xf32> to vector<16x16x128xf32>
    %24 = arith.mulf %19, %23 : vector<16x16x128xf32>
    %25 = arith.addf %18, %24 : vector<16x16x128xf32>
    %26 = vector.extract_strided_slice %1 {offsets = [1, 0, 0], sizes = [16, 16, 128], strides = [1, 1, 1]} : vector<18x18x128xf32> to vector<16x16x128xf32>
    %27 = vector.extract_strided_slice %2 {offsets = [3, 0], sizes = [1, 128], strides = [1, 1]} : vector<9x128xf32> to vector<1x128xf32>
    %28 = vector.shape_cast %27 : vector<1x128xf32> to vector<128xf32>
    %29 = vector.shape_cast %28 : vector<128xf32> to vector<1x1x128xf32>
    %30 = vector.broadcast %29 : vector<1x1x128xf32> to vector<16x16x128xf32>
    %31 = arith.mulf %26, %30 : vector<16x16x128xf32>
    %32 = arith.addf %25, %31 : vector<16x16x128xf32>
    %33 = vector.extract_strided_slice %1 {offsets = [1, 1, 0], sizes = [16, 16, 128], strides = [1, 1, 1]} : vector<18x18x128xf32> to vector<16x16x128xf32>
    %34 = vector.extract_strided_slice %2 {offsets = [4, 0], sizes = [1, 128], strides = [1, 1]} : vector<9x128xf32> to vector<1x128xf32>
    %35 = vector.shape_cast %34 : vector<1x128xf32> to vector<128xf32>
    %36 = vector.shape_cast %35 : vector<128xf32> to vector<1x1x128xf32>
    %37 = vector.broadcast %36 : vector<1x1x128xf32> to vector<16x16x128xf32>
    %38 = arith.mulf %33, %37 : vector<16x16x128xf32>
    %39 = arith.addf %32, %38 : vector<16x16x128xf32>
    %40 = vector.extract_strided_slice %1 {offsets = [1, 2, 0], sizes = [16, 16, 128], strides = [1, 1, 1]} : vector<18x18x128xf32> to vector<16x16x128xf32>
    %41 = vector.extract_strided_slice %2 {offsets = [5, 0], sizes = [1, 128], strides = [1, 1]} : vector<9x128xf32> to vector<1x128xf32>
    %42 = vector.shape_cast %41 : vector<1x128xf32> to vector<128xf32>
    %43 = vector.shape_cast %42 : vector<128xf32> to vector<1x1x128xf32>
    %44 = vector.broadcast %43 : vector<1x1x128xf32> to vector<16x16x128xf32>
    %45 = arith.mulf %40, %44 : vector<16x16x128xf32>
    %46 = arith.addf %39, %45 : vector<16x16x128xf32>
    %47 = vector.extract_strided_slice %1 {offsets = [2, 0, 0], sizes = [16, 16, 128], strides = [1, 1, 1]} : vector<18x18x128xf32> to vector<16x16x128xf32>
    %48 = vector.extract_strided_slice %2 {offsets = [6, 0], sizes = [1, 128], strides = [1, 1]} : vector<9x128xf32> to vector<1x128xf32>
    %49 = vector.shape_cast %48 : vector<1x128xf32> to vector<128xf32>
    %50 = vector.shape_cast %49 : vector<128xf32> to vector<1x1x128xf32>
    %51 = vector.broadcast %50 : vector<1x1x128xf32> to vector<16x16x128xf32>
    %52 = arith.mulf %47, %51 : vector<16x16x128xf32>
    %53 = arith.addf %46, %52 : vector<16x16x128xf32>
    %54 = vector.extract_strided_slice %1 {offsets = [2, 1, 0], sizes = [16, 16, 128], strides = [1, 1, 1]} : vector<18x18x128xf32> to vector<16x16x128xf32>
    %55 = vector.extract_strided_slice %2 {offsets = [7, 0], sizes = [1, 128], strides = [1, 1]} : vector<9x128xf32> to vector<1x128xf32>
    %56 = vector.shape_cast %55 : vector<1x128xf32> to vector<128xf32>
    %57 = vector.shape_cast %56 : vector<128xf32> to vector<1x1x128xf32>
    %58 = vector.broadcast %57 : vector<1x1x128xf32> to vector<16x16x128xf32>
    %59 = arith.mulf %54, %58 : vector<16x16x128xf32>
    %60 = arith.addf %53, %59 : vector<16x16x128xf32>
    %61 = vector.extract_strided_slice %1 {offsets = [2, 2, 0], sizes = [16, 16, 128], strides = [1, 1, 1]} : vector<18x18x128xf32> to vector<16x16x128xf32>
    %62 = vector.extract_strided_slice %2 {offsets = [8, 0], sizes = [1, 128], strides = [1, 1]} : vector<9x128xf32> to vector<1x128xf32>
    %63 = vector.shape_cast %62 : vector<1x128xf32> to vector<128xf32>
    %64 = vector.shape_cast %63 : vector<128xf32> to vector<1x1x128xf32>
    %65 = vector.broadcast %64 : vector<1x1x128xf32> to vector<16x16x128xf32>
    %66 = arith.mulf %61, %65 : vector<16x16x128xf32>
    %67 = arith.addf %60, %66 : vector<16x16x128xf32>
    %68 = vector.shape_cast %67 : vector<16x16x128xf32> to vector<256x128xf32>
    %cst_7 = arith.constant dense<0.000000e+00> : vector<256x128xf32>
    %69 = tpu.matmul %68, %3, %cst_7 {dimension_numbers = #tpu.dot_dimension_numbers<[1], [0], [0], [1], [0, 0, 1, 1], [], []>} : vector<256x128xf32>, vector<128x128xf32>, vector<256x128xf32> -> vector<256x128xf32>
    %cst_8 = arith.constant dense<0.000000e+00> : vector<128xf32>
    %70 = vector.multi_reduction <add>, %69, %cst_8 [0] : vector<256x128xf32> to vector<128xf32>
    %71 = vector.shape_cast %70 : vector<128xf32> to vector<1x128xf32>
    %72 = arith.mulf %69, %69 : vector<256x128xf32>
    %cst_9 = arith.constant dense<0.000000e+00> : vector<128xf32>
    %73 = vector.multi_reduction <add>, %72, %cst_9 [0] : vector<256x128xf32> to vector<128xf32>
    %74 = vector.shape_cast %73 : vector<128xf32> to vector<1x128xf32>
    %75 = vector.shape_cast %69 : vector<256x128xf32> to vector<1x16x16x128xf32>
    %c0_10 = arith.constant 0 : index
    %c0_11 = arith.constant 0 : index
    %c0_12 = arith.constant 0 : index
    %c0_13 = arith.constant 0 : index
    %76 = vector.load %arg4[%c0_10, %c0_11, %c0_12, %c0_13] : memref<1x16x16x128xf32, #tpu.memory_space<vmem>>, vector<1x16x16x128xf32>
    tpu.vector_store %arg4[%c0_10, %c0_11, %c0_12, %c0_13], %75 {strides = array<i32>} : memref<1x16x16x128xf32, #tpu.memory_space<vmem>>, vector<1x16x16x128xf32>,
    %77 = tpu.concatenate %71, %74 in 0 : vector<1x128xf32>, vector<1x128xf32> -> vector<2x128xf32>
    %78 = vector.shape_cast %77 : vector<2x128xf32> to vector<1x2x128xf32>
    %c0_14 = arith.constant 0 : index
    %c0_15 = arith.constant 0 : index
    %c0_16 = arith.constant 0 : index
    %79 = vector.load %arg5[%c0_14, %c0_15, %c0_16] : memref<1x2x128xf32, #tpu.memory_space<vmem>>, vector<1x2x128xf32>
    tpu.vector_store %arg5[%c0_14, %c0_15, %c0_16], %78 {strides = array<i32>} : memref<1x2x128xf32, #tpu.memory_space<vmem>>, vector<1x2x128xf32>,
    return
  }
  func.func @transform_0(%arg0: i32) -> (i32, i32, i32, i32) {
    %c0_i32 = arith.constant 0 : i32
    %c0_i32_0 = arith.constant 0 : i32
    %c0_i32_1 = arith.constant 0 : i32
    %c0_i32_2 = arith.constant 0 : i32
    return %arg0, %c0_i32, %c0_i32_0, %c0_i32_1 : i32, i32, i32, i32
  }
  func.func @transform_1(%arg0: i32) -> (i32, i32) {
    %c0_i32 = arith.constant 0 : i32
    %c0_i32_0 = arith.constant 0 : i32
    %c0_i32_1 = arith.constant 0 : i32
    return %c0_i32, %c0_i32_0 : i32, i32
  }
  func.func @transform_2(%arg0: i32) -> (i32, i32) {
    %c0_i32 = arith.constant 0 : i32
    %c0_i32_0 = arith.constant 0 : i32
    %c0_i32_1 = arith.constant 0 : i32
    return %c0_i32, %c0_i32_0 : i32, i32
  }
  func.func @transform_3(%arg0: i32) -> (i32, i32, i32, i32) {
    %c0_i32 = arith.constant 0 : i32
    %c0_i32_0 = arith.constant 0 : i32
    %c0_i32_1 = arith.constant 0 : i32
    %c0_i32_2 = arith.constant 0 : i32
    return %arg0, %c0_i32, %c0_i32_0, %c0_i32_1 : i32, i32, i32, i32
  }
  func.func @transform_4(%arg0: i32) -> (i32, i32, i32) {
    %c0_i32 = arith.constant 0 : i32
    %c0_i32_0 = arith.constant 0 : i32
    %c0_i32_1 = arith.constant 0 : i32
    return %arg0, %c0_i32, %c0_i32_0 : i32, i32, i32
  }
}

</mosaic_0001>

<llo_original>
// kernel: tpu_custom_call.1
$region0: #{tpu_custom_call.1}
  #allocation0 [shape = 'u32[]', space=smem, size = 0x4, offset = 0x4, fixed_abs, tag = 'smem constant byte address 0x4 - core index']
  #allocation1 [shape = 'u32[72,128]{1,0:T(1,128)}', space=vmem, size = 0x9000, scoped, tag = 'internal scratch']
  %s0 = inlined_call_operand.vmem [shape: f32[2,18,18,128], index: 0, kind: input, shape index: {}]
  %s1 = inlined_call_operand.vmem [shape: f32[9,128], index: 1, kind: input, shape index: {}]
  %s2 = inlined_call_operand.vmem [shape: f32[128,128], index: 2, kind: input, shape index: {}]
  %s3 = inlined_call_operand.hbm [shape: f32[2,16,16,128], index: 3, kind: output, shape index: {0}]
  %s4 = inlined_call_operand.hbm [shape: f32[2,2,128], index: 4, kind: output, shape index: {1}]
  %5 = xla_tuple %s3, %s4
  %s6 = sld [smem:[#allocation0]]
  $region53: #{tpu_custom_call.1} parent=0
    _
  %s8 = ssub.s32 1, %s6
  %s9 = scalar_select 0, %s8, %s6
  $region1: #{tpu_custom_call.1} parent=0
    #allocation2 [shape = 'u8[262144]{0}', space=vmem, size = 0x40000, scoped, tag = 'output window, operand 0']
    #allocation3 [shape = 's32[2]{0}', space=sflag, size = 0x8, scoped, tag = 'scoped memory for tpu_custom_call.1']
    #allocation4 [shape = 'u8[2048]{0}', space=vmem, size = 0x800, scoped, tag = 'output window, operand 1']
    #allocation5 [shape = 's32[2]{0}', space=sflag, size = 0x8, scoped, tag = 'scoped memory for tpu_custom_call.1']
    %10 = vsyncpa [#allocation3], 0
    %s11 = scalar_lea.sflag [#allocation3], 1
    %12 = vsyncpa %s11, 0
    %13 = vsyncpa [#allocation5], 0
    %s14 = scalar_lea.sflag [#allocation5], 1
    %15 = vsyncpa %s14, 0
    loop: start=0, step=1, limit=4
    $region2: #{tpu_custom_call.1} parent=1 // loop_pre_header
      _
    $region3: #{tpu_custom_call.1} parent=1 // loop_header
      %s17 = sphi 0, %s21
      %p18 = scmp.ge.s32.totalorder %s17, 4
      %s27 = sphi 0, %s29
      %s30 = sphi 0, %s27
      %s31 = sphi 0, %s30
      %s47 = sphi 0, %s31
      %s51 = sphi 0, %s51
      %s53 = sphi 0, %s51
      %s54 = sphi 0, %s53
      %s68 = sphi 0, %s54
      %s72 = sphi 0, %s72
      %s74 = sphi 0, %s72
      %s75 = sphi 0, %s74
      %s89 = sphi 0, %s75
      %s95 = sphi 0, %s97
      %s98 = sphi 0, %s95
      %s99 = sphi 0, %s98
      %s115 = sphi 0, %s99
      %s121 = sphi 0, %s123
      %s124 = sphi 0, %s121
      %s125 = sphi 0, %s124
      %s141 = sphi 0, %s125
    $region4: #{tpu_custom_call.1} parent=1 // loop_header_branch
      %20 = sbr.rel (%p18) target = $region8
    $region5: #{tpu_custom_call.1} parent=1 // loop_body
      %s22 = ssub.s32 %s17, 1
      %s23 = ssub.s32 %s17, 2
      %s24 = sadd.s32 %s17, 1
      %s25 = ssub.s32 %s17, %s24
      %p26 = scmp.eq.s32.totalorder %s25, 0
      %s28 = sadd.s32 %s27, 1
      %s29 = scalar_select %p26, %s27, %s28
      %p32 = pneg %p26
      %p33 = scmp.eq.s32.totalorder %s17, 1
      %p34 = por %p32, %p33
      %p35 = scmp.ne.s32.totalorder %s27, %s30
      %p36 = scmp.eq.s32.totalorder %s17, 0
      %p37 = por %p35, %p36
      %p38 = scmp.ne.s32.totalorder %s27, %s30
      %p39 = scmp.eq.s32.totalorder %s22, 1
      %p40 = por %p38, %p39
      %p41 = scmp.ne.s32.totalorder %s30, %s31
      %p42 = scmp.eq.s32.totalorder %s22, 0
      %p43 = por %p41, %p42
      %p44 = scmp.ne.s32.totalorder %s30, %s31
      %p45 = scmp.eq.s32.totalorder %s23, 1
      %p46 = por %p44, %p45
      %p48 = scmp.ne.s32.totalorder %s31, %s47
      %p49 = scmp.eq.s32.totalorder %s23, 0
      %p50 = por %p48, %p49
      %s52 = sadd.s32 %s51, 1
      %p55 = scmp.eq.s32.totalorder %s17, 1
      %p56 = scmp.ne.s32.totalorder %s51, %s53
      %p57 = scmp.eq.s32.totalorder %s17, 0
      %p58 = por %p56, %p57
      %p59 = scmp.ne.s32.totalorder %s51, %s53
      %p60 = scmp.eq.s32.totalorder %s22, 1
      %p61 = por %p59, %p60
      %p62 = scmp.ne.s32.totalorder %s53, %s54
      %p63 = scmp.eq.s32.totalorder %s22, 0
      %p64 = por %p62, %p63
      %p65 = scmp.ne.s32.totalorder %s53, %s54
      %p66 = scmp.eq.s32.totalorder %s23, 1
      %p67 = por %p65, %p66
      %p69 = scmp.ne.s32.totalorder %s54, %s68
      %p70 = scmp.eq.s32.totalorder %s23, 0
      %p71 = por %p69, %p70
      %s73 = sadd.s32 %s72, 1
      %p76 = scmp.eq.s32.totalorder %s17, 1
      %p77 = scmp.ne.s32.totalorder %s72, %s74
      %p78 = scmp.eq.s32.totalorder %s17, 0
      %p79 = por %p77, %p78
      %p80 = scmp.ne.s32.totalorder %s72, %s74
      %p81 = scmp.eq.s32.totalorder %s22, 1
      %p82 = por %p80, %p81
      %p83 = scmp.ne.s32.totalorder %s74, %s75
      %p84 = scmp.eq.s32.totalorder %s22, 0
      %p85 = por %p83, %p84
      %p86 = scmp.ne.s32.totalorder %s74, %s75
      %p87 = scmp.eq.s32.totalorder %s23, 1
      %p88 = por %p86, %p87
      %p90 = scmp.ne.s32.totalorder %s75, %s89
      %p91 = scmp.eq.s32.totalorder %s23, 0
      %p92 = por %p90, %p91
      %s93 = ssub.s32 %s17, %s24
      %p94 = scmp.eq.s32.totalorder %s93, 0
      %s96 = sadd.s32 %s95, 1
      %s97 = scalar_select %p94, %s95, %s96
      %p100 = pneg %p94
      %p101 = scmp.eq.s32.totalorder %s17, 1
      %p102 = por %p100, %p101
      %p103 = scmp.ne.s32.totalorder %s95, %s98
      %p104 = scmp.eq.s32.totalorder %s17, 0
      %p105 = por %p103, %p104
      %p106 = scmp.ne.s32.totalorder %s95, %s98
      %p107 = scmp.eq.s32.totalorder %s22, 1
      %p108 = por %p106, %p107
      %p109 = scmp.ne.s32.totalorder %s98, %s99
      %p110 = scmp.eq.s32.totalorder %s22, 0
      %p111 = por %p109, %p110
      %p112 = scmp.ne.s32.totalorder %s98, %s99
      %p113 = scmp.eq.s32.totalorder %s23, 1
      %p114 = por %p112, %p113
      %p116 = scmp.ne.s32.totalorder %s99, %s115
      %p117 = scmp.eq.s32.totalorder %s23, 0
      %p118 = por %p116, %p117
      %s119 = ssub.s32 %s17, %s24
      %p120 = scmp.eq.s32.totalorder %s119, 0
      %s122 = sadd.s32 %s121, 1
      %s123 = scalar_select %p120, %s121, %s122
      %p126 = pneg %p120
      %p127 = scmp.eq.s32.totalorder %s17, 1
      %p128 = por %p126, %p127
      %p129 = scmp.ne.s32.totalorder %s121, %s124
      %p130 = scmp.eq.s32.totalorder %s17, 0
      %p131 = por %p129, %p130
      %p132 = scmp.ne.s32.totalorder %s121, %s124
      %p133 = scmp.eq.s32.totalorder %s22, 1
      %p134 = por %p132, %p133
      %p135 = scmp.ne.s32.totalorder %s124, %s125
      %p136 = scmp.eq.s32.totalorder %s22, 0
      %p137 = por %p135, %p136
      %p138 = scmp.ne.s32.totalorder %s124, %s125
      %p139 = scmp.eq.s32.totalorder %s23, 1
      %p140 = por %p138, %p139
      %p142 = scmp.ne.s32.totalorder %s125, %s141
      %p143 = scmp.eq.s32.totalorder %s23, 0
      %p144 = por %p142, %p143
      %p145 = scmp.le.s32.totalorder 1, %s17
      %p146 = scmp.lt.s32.totalorder %s17, 3
      %p147 = pnand %p145, %p146
      %p148 = pneg %p147
      // Predicated region
      $region9: #{tpu_custom_call.1} parent=5 // pred_check
        _
      $region10: #{tpu_custom_call.1} parent=5 // pred_check_branch
        %150 = sbr.rel (%p147) target = $region12
      $region11: #{tpu_custom_call.1} parent=5 // pred_region
        %s151 = ssub.s32 %s17, 1
        // Predicated region
        $region13: #{tpu_custom_call.1} parent=11 // pred_check
          %p152 = pneg %p64
        $region14: #{tpu_custom_call.1} parent=11 // pred_check_branch
          %154 = sbr.rel (%p152) target = $region16
        $region15: #{tpu_custom_call.1} parent=11 // pred_region
          _
        $region16: #{tpu_custom_call.1} parent=11 // pred_fallthru
          _
        // Predicated region
        $region17: #{tpu_custom_call.1} parent=11 // pred_check
          %p155 = pneg %p85
        $region18: #{tpu_custom_call.1} parent=11 // pred_check_branch
          %157 = sbr.rel (%p155) target = $region20
        $region19: #{tpu_custom_call.1} parent=11 // pred_region
          _
        $region20: #{tpu_custom_call.1} parent=11 // pred_fallthru
          _
      $region12: #{tpu_custom_call.1} parent=5 // pred_fallthru
        _
      %p158 = scmp.lt.s32.totalorder %s17, 2
      // Predicated region
      $region21: #{tpu_custom_call.1} parent=5 // pred_check
        %p159 = pneg %p158
      $region22: #{tpu_custom_call.1} parent=5 // pred_check_branch
        %161 = sbr.rel (%p159) target = $region24
      $region23: #{tpu_custom_call.1} parent=5 // pred_region
        // Predicated region
        $region25: #{tpu_custom_call.1} parent=23 // pred_check
          %p162 = pneg %p37
        $region26: #{tpu_custom_call.1} parent=23 // pred_check_branch
          %164 = sbr.rel (%p162) target = $region28
        $region27: #{tpu_custom_call.1} parent=23 // pred_region
          %p165 = scmp.lt.s32.totalorder %s17, 1
          %s166 = scalar_select %p165, %s17, 1
          %s167 = smul.addr %s166, 54
          %s168 = smul.addr %s167, 8
          %s169 = scalar_lea.vmem %s0, %s168
        $region28: #{tpu_custom_call.1} parent=23 // pred_fallthru
          _
      $region24: #{tpu_custom_call.1} parent=5 // pred_fallthru
        _
      %p170 = scmp.le.s32.totalorder 1, %s17
      %p171 = scmp.lt.s32.totalorder %s17, 3
      %p172 = pnand %p170, %p171
      %p173 = pneg %p172
      // Predicated region
      $region29: #{tpu_custom_call.1} parent=5 // pred_check
        _
      $region30: #{tpu_custom_call.1} parent=5 // pred_check_branch
        %175 = sbr.rel (%p172) target = $region32
      $region31: #{tpu_custom_call.1} parent=5 // pred_region
        %s176 = ssub.s32 %s17, 1
        %p177 = scmp.lt.s32.totalorder %s22, 1
        %s178 = scalar_select %p177, %s22, 1
        %s179 = smul.addr %s178, 54
        %s180 = smul.addr %s179, 8
        %s181 = scalar_lea.vmem %s0, %s180
        %p182 = pneg %p43
        %p183 = pneg %p40
        %p184 = pneg %p64
        %p185 = pneg %p61
        %p186 = pneg %p85
        %p187 = pneg %p82
        %p188 = pneg %p111
        %p189 = pneg %p108
        %s190 = sand.u32 %s98, 1
        %s191 = scalar_lea.sflag [#allocation3], %s190
        %s192 = sand.u32 %s98, 1
        %s193 = smul.addr %s192, 256
        %s194 = scalar_lea.vmem [#allocation2], %s193
        %p195 = pneg %p137
        %p196 = pneg %p134
        %s197 = sand.u32 %s124, 1
        %s198 = scalar_lea.sflag [#allocation5], %s197
        %s199 = sand.u32 %s124, 1
        %s200 = smul.addr %s199, 2
        %s201 = scalar_lea.vmem [#allocation4], %s200
        %p202 = scmp.lt.s32.totalorder %s22, 1
        %s203 = scalar_select %p202, %s22, 1
        %s204 = smul.addr %s203, 54
        %s205 = smul.addr %s204, 8
        %s206 = scalar_lea.vmem %s0, %s205
        %v207 = vld [vmem:[%s206] sm:$0xff]
        %v208 = vld [vmem:[%s206 + $0x8] sm:$0xff]
        %v209 = vld [vmem:[%s206 + $0x10] sm:$0x3]
        %v210 = vld [vmem:[%s206 + $0x18] sm:$0xff]
        %v211 = vld [vmem:[%s206 + $0x20] sm:$0xff]
        %v212 = vld [vmem:[%s206 + $0x28] sm:$0x3]
        %v213 = vld [vmem:[%s206 + $0x30] sm:$0xff]
        %v214 = vld [vmem:[%s206 + $0x38] sm:$0xff]
        %v215 = vld [vmem:[%s206 + $0x40] sm:$0x3]
        %v216 = vld [vmem:[%s206 + $0x48] sm:$0xff]
        %v217 = vld [vmem:[%s206 + $0x50] sm:$0xff]
        %v218 = vld [vmem:[%s206 + $0x58] sm:$0x3]
        %v219 = vld [vmem:[%s206 + $0x60] sm:$0xff]
        %v220 = vld [vmem:[%s206 + $0x68] sm:$0xff]
        %v221 = vld [vmem:[%s206 + $0x70] sm:$0x3]
        %v222 = vld [vmem:[%s206 + $0x78] sm:$0xff]
        %v223 = vld [vmem:[%s206 + $0x80] sm:$0xff]
        %v224 = vld [vmem:[%s206 + $0x88] sm:$0x3]
        %v225 = vld [vmem:[%s206 + $0x90] sm:$0xff]
        %v226 = vld [vmem:[%s206 + $0x98] sm:$0xff]
        %v227 = vld [vmem:[%s206 + $0xa0] sm:$0x3]
        %v228 = vld [vmem:[%s206 + $0xa8] sm:$0xff]
        %v229 = vld [vmem:[%s206 + $0xb0] sm:$0xff]
        %v230 = vld [vmem:[%s206 + $0xb8] sm:$0x3]
        %v231 = vld [vmem:[%s206 + $0xc0] sm:$0xff]
        %v232 = vld [vmem:[%s206 + $0xc8] sm:$0xff]
        %v233 = vld [vmem:[%s206 + $0xd0] sm:$0x3]
        %v234 = vld [vmem:[%s206 + $0xd8] sm:$0xff]
        %v235 = vld [vmem:[%s206 + $0xe0] sm:$0xff]
        %v236 = vld [vmem:[%s206 + $0xe8] sm:$0x3]
        %v237 = vld [vmem:[%s206 + $0xf0] sm:$0xff]
        %v238 = vld [vmem:[%s206 + $0xf8] sm:$0xff]
        %v239 = vld [vmem:[%s206 + $0x100] sm:$0x3]
        %v240 = vld [vmem:[%s206 + $0x108] sm:$0xff]
        %v241 = vld [vmem:[%s206 + $0x110] sm:$0xff]
        %v242 = vld [vmem:[%s206 + $0x118] sm:$0x3]
        %v243 = vld [vmem:[%s206 + $0x120] sm:$0xff]
        %v244 = vld [vmem:[%s206 + $0x128] sm:$0xff]
        %v245 = vld [vmem:[%s206 + $0x130] sm:$0x3]
        %v246 = vld [vmem:[%s206 + $0x138] sm:$0xff]
        %v247 = vld [vmem:[%s206 + $0x140] sm:$0xff]
        %v248 = vld [vmem:[%s206 + $0x148] sm:$0x3]
        %v249 = vld [vmem:[%s206 + $0x150] sm:$0xff]
        %v250 = vld [vmem:[%s206 + $0x158] sm:$0xff]
        %v251 = vld [vmem:[%s206 + $0x160] sm:$0x3]
        %v252 = vld [vmem:[%s206 + $0x168] sm:$0xff]
        %v253 = vld [vmem:[%s206 + $0x170] sm:$0xff]
        %v254 = vld [vmem:[%s206 + $0x178] sm:$0x3]
        %v255 = vld [vmem:[%s206 + $0x180] sm:$0xff]
        %v256 = vld [vmem:[%s206 + $0x188] sm:$0xff]
        %v257 = vld [vmem:[%s206 + $0x190] sm:$0x3]
        %v258 = vld [vmem:[%s206 + $0x198] sm:$0xff]
        %v259 = vld [vmem:[%s206 + $0x1a0] sm:$0xff]
        %v260 = vld [vmem:[%s206 + $0x1a8] sm:$0x3]
        %v261 = vld [vmem:[%s1] sm:$0xff]
        %v262 = vld [vmem:[%s1 + $0x8] sm:$0x1]
        %v263 = vld [vmem:[%s2] sm:$0xff]
        %v264 = vld [vmem:[%s2 + $0x8] sm:$0xff]
        %v265 = vld [vmem:[%s2 + $0x10] sm:$0xff]
        %v266 = vld [vmem:[%s2 + $0x18] sm:$0xff]
        %v267 = vld [vmem:[%s2 + $0x20] sm:$0xff]
        %v268 = vld [vmem:[%s2 + $0x28] sm:$0xff]
        %v269 = vld [vmem:[%s2 + $0x30] sm:$0xff]
        %v270 = vld [vmem:[%s2 + $0x38] sm:$0xff]
        %v271 = vld [vmem:[%s2 + $0x40] sm:$0xff]
        %v272 = vld [vmem:[%s2 + $0x48] sm:$0xff]
        %v273 = vld [vmem:[%s2 + $0x50] sm:$0xff]
        %v274 = vld [vmem:[%s2 + $0x58] sm:$0xff]
        %v275 = vld [vmem:[%s2 + $0x60] sm:$0xff]
        %v276 = vld [vmem:[%s2 + $0x68] sm:$0xff]
        %v277 = vld [vmem:[%s2 + $0x70] sm:$0xff]
        %v278 = vld [vmem:[%s2 + $0x78] sm:$0xff]
        %v279 = vperm.slane %v261, 0
        %v280 = vmul.f32 %v207, %v279
        %v281 = vmul.f32 %v208, %v279
        %v282 = vmul.f32 %v210, %v279
        %v283 = vmul.f32 %v211, %v279
        %v284 = vmul.f32 %v213, %v279
        %v285 = vmul.f32 %v214, %v279
        %v286 = vmul.f32 %v216, %v279
        %v287 = vmul.f32 %v217, %v279
        %v288 = vmul.f32 %v219, %v279
        %v289 = vmul.f32 %v220, %v279
        %v290 = vmul.f32 %v222, %v279
        %v291 = vmul.f32 %v223, %v279
        %v292 = vmul.f32 %v225, %v279
        %v293 = vmul.f32 %v226, %v279
        %v294 = vmul.f32 %v228, %v279
        %v295 = vmul.f32 %v229, %v279
        %v296 = vmul.f32 %v231, %v279
        %v297 = vmul.f32 %v232, %v279
        %v298 = vmul.f32 %v234, %v279
        %v299 = vmul.f32 %v235, %v279
        %v300 = vmul.f32 %v237, %v279
        %v301 = vmul.f32 %v238, %v279
        %v302 = vmul.f32 %v240, %v279
        %v303 = vmul.f32 %v241, %v279
        %v304 = vmul.f32 %v243, %v279
        %v305 = vmul.f32 %v244, %v279
        %v306 = vmul.f32 %v246, %v279
        %v307 = vmul.f32 %v247, %v279
        %v308 = vmul.f32 %v249, %v279
        %v309 = vmul.f32 %v250, %v279
        %v310 = vmul.f32 %v252, %v279
        %v311 = vmul.f32 %v253, %v279
        %v312 = vadd.f32 %v280, 0.0
        %v313 = vadd.f32 %v281, 0.0
        %v314 = vadd.f32 %v282, 0.0
        %v315 = vadd.f32 %v283, 0.0
        %v316 = vadd.f32 %v284, 0.0
        %v317 = vadd.f32 %v285, 0.0
        %v318 = vadd.f32 %v286, 0.0
        %v319 = vadd.f32 %v287, 0.0
        %v320 = vadd.f32 %v288, 0.0
        %v321 = vadd.f32 %v289, 0.0
        %v322 = vadd.f32 %v290, 0.0
        %v323 = vadd.f32 %v291, 0.0
        %v324 = vadd.f32 %v292, 0.0
        %v325 = vadd.f32 %v293, 0.0
        %v326 = vadd.f32 %v294, 0.0
        %v327 = vadd.f32 %v295, 0.0
        %v328 = vadd.f32 %v296, 0.0
        %v329 = vadd.f32 %v297, 0.0
        %v330 = vadd.f32 %v298, 0.0
        %v331 = vadd.f32 %v299, 0.0
        %v332 = vadd.f32 %v300, 0.0
        %v333 = vadd.f32 %v301, 0.0
        %v334 = vadd.f32 %v302, 0.0
        %v335 = vadd.f32 %v303, 0.0
        %v336 = vadd.f32 %v304, 0.0
        %v337 = vadd.f32 %v305, 0.0
        %v338 = vadd.f32 %v306, 0.0
        %v339 = vadd.f32 %v307, 0.0
        %v340 = vadd.f32 %v308, 0.0
        %v341 = vadd.f32 %v309, 0.0
        %v342 = vadd.f32 %v310, 0.0
        %v343 = vadd.f32 %v311, 0.0
        %v344 = vperm.slane %v261, 1
        %v345 = vmul.f32 %v207, %v344
        %v346 = vmul.f32 %v208, %v344
        %v347 = vmul.f32 %v209, %v344
        %v348 = vmul.f32 %v210, %v344
        %v349 = vmul.f32 %v211, %v344
        %v350 = vmul.f32 %v212, %v344
        %v351 = vmul.f32 %v213, %v344
        %v352 = vmul.f32 %v214, %v344
        %v353 = vmul.f32 %v215, %v344
        %v354 = vmul.f32 %v216, %v344
        %v355 = vmul.f32 %v217, %v344
        %v356 = vmul.f32 %v218, %v344
        %v357 = vmul.f32 %v219, %v344
        %v358 = vmul.f32 %v220, %v344
        %v359 = vmul.f32 %v221, %v344
        %v360 = vmul.f32 %v222, %v344
        %v361 = vmul.f32 %v223, %v344
        %v362 = vmul.f32 %v224, %v344
        %v363 = vmul.f32 %v225, %v344
        %v364 = vmul.f32 %v226, %v344
        %v365 = vmul.f32 %v227, %v344
        %v366 = vmul.f32 %v228, %v344
        %v367 = vmul.f32 %v229, %v344
        %v368 = vmul.f32 %v230, %v344
        %v369 = vmul.f32 %v231, %v344
        %v370 = vmul.f32 %v232, %v344
        %v371 = vmul.f32 %v233, %v344
        %v372 = vmul.f32 %v234, %v344
        %v373 = vmul.f32 %v235, %v344
        %v374 = vmul.f32 %v236, %v344
        %v375 = vmul.f32 %v237, %v344
        %v376 = vmul.f32 %v238, %v344
        %v377 = vmul.f32 %v239, %v344
        %v378 = vmul.f32 %v240, %v344
        %v379 = vmul.f32 %v241, %v344
        %v380 = vmul.f32 %v242, %v344
        %v381 = vmul.f32 %v243, %v344
        %v382 = vmul.f32 %v244, %v344
        %v383 = vmul.f32 %v245, %v344
        %v384 = vmul.f32 %v246, %v344
        %v385 = vmul.f32 %v247, %v344
        %v386 = vmul.f32 %v248, %v344
        %v387 = vmul.f32 %v249, %v344
        %v388 = vmul.f32 %v250, %v344
        %v389 = vmul.f32 %v251, %v344
        %v390 = vmul.f32 %v252, %v344
        %v391 = vmul.f32 %v253, %v344
        %v392 = vmul.f32 %v254, %v344
        %vm441 = vcmask 1046528
        %v442 = vrot.slane %v345, 1
        %v443 = vrot.slane %v346, 1
        %v444 = vsel %vm441, %v442, %v443
        %v445 = vrot.slane %v347, 1
        %v446 = vsel %vm441, %v443, %v445
        %v447 = vrot.slane %v348, 1
        %v448 = vrot.slane %v349, 1
        %v449 = vsel %vm441, %v447, %v448
        %v450 = vrot.slane %v350, 1
        %v451 = vsel %vm441, %v448, %v450
        %v452 = vrot.slane %v351, 1
        %v453 = vrot.slane %v352, 1
        %v454 = vsel %vm441, %v452, %v453
        %v455 = vrot.slane %v353, 1
        %v456 = vsel %vm441, %v453, %v455
        %v457 = vrot.slane %v354, 1
        %v458 = vrot.slane %v355, 1
        %v459 = vsel %vm441, %v457, %v458
        %v460 = vrot.slane %v356, 1
        %v461 = vsel %vm441, %v458, %v460
        %v462 = vrot.slane %v357, 1
        %v463 = vrot.slane %v358, 1
        %v464 = vsel %vm441, %v462, %v463
        %v465 = vrot.slane %v359, 1
        %v466 = vsel %vm441, %v463, %v465
        %v467 = vrot.slane %v360, 1
        %v468 = vrot.slane %v361, 1
        %v469 = vsel %vm441, %v467, %v468
        %v470 = vrot.slane %v362, 1
        %v471 = vsel %vm441, %v468, %v470
        %v472 = vrot.slane %v363, 1
        %v473 = vrot.slane %v364, 1
        %v474 = vsel %vm441, %v472, %v473
        %v475 = vrot.slane %v365, 1
        %v476 = vsel %vm441, %v473, %v475
        %v477 = vrot.slane %v366, 1
        %v478 = vrot.slane %v367, 1
        %v479 = vsel %vm441, %v477, %v478
        %v480 = vrot.slane %v368, 1
        %v481 = vsel %vm441, %v478, %v480
        %v482 = vrot.slane %v369, 1
        %v483 = vrot.slane %v370, 1
        %v484 = vsel %vm441, %v482, %v483
        %v485 = vrot.slane %v371, 1
        %v486 = vsel %vm441, %v483, %v485
        %v487 = vrot.slane %v372, 1
        %v488 = vrot.slane %v373, 1
        %v489 = vsel %vm441, %v487, %v488
        %v490 = vrot.slane %v374, 1
        %v491 = vsel %vm441, %v488, %v490
        %v492 = vrot.slane %v375, 1
        %v493 = vrot.slane %v376, 1
        %v494 = vsel %vm441, %v492, %v493
        %v495 = vrot.slane %v377, 1
        %v496 = vsel %vm441, %v493, %v495
        %v497 = vrot.slane %v378, 1
        %v498 = vrot.slane %v379, 1
        %v499 = vsel %vm441, %v497, %v498
        %v500 = vrot.slane %v380, 1
        %v501 = vsel %vm441, %v498, %v500
        %v502 = vrot.slane %v381, 1
        %v503 = vrot.slane %v382, 1
        %v504 = vsel %vm441, %v502, %v503
        %v505 = vrot.slane %v383, 1
        %v506 = vsel %vm441, %v503, %v505
        %v507 = vrot.slane %v384, 1
        %v508 = vrot.slane %v385, 1
        %v509 = vsel %vm441, %v507, %v508
        %v510 = vrot.slane %v386, 1
        %v511 = vsel %vm441, %v508, %v510
        %v512 = vrot.slane %v387, 1
        %v513 = vrot.slane %v388, 1
        %v514 = vsel %vm441, %v512, %v513
        %v515 = vrot.slane %v389, 1
        %v516 = vsel %vm441, %v513, %v515
        %v517 = vrot.slane %v390, 1
        %v518 = vrot.slane %v391, 1
        %v519 = vsel %vm441, %v517, %v518
        %v520 = vrot.slane %v392, 1
        %v521 = vsel %vm441, %v518, %v520
        %v554 = vadd.f32 %v312, %v444
        %v555 = vadd.f32 %v313, %v446
        %v556 = vadd.f32 %v314, %v449
        %v557 = vadd.f32 %v315, %v451
        %v558 = vadd.f32 %v316, %v454
        %v559 = vadd.f32 %v317, %v456
        %v560 = vadd.f32 %v318, %v459
        %v561 = vadd.f32 %v319, %v461
        %v562 = vadd.f32 %v320, %v464
        %v563 = vadd.f32 %v321, %v466
        %v564 = vadd.f32 %v322, %v469
        %v565 = vadd.f32 %v323, %v471
        %v566 = vadd.f32 %v324, %v474
        %v567 = vadd.f32 %v325, %v476
        %v568 = vadd.f32 %v326, %v479
        %v569 = vadd.f32 %v327, %v481
        %v570 = vadd.f32 %v328, %v484
        %v571 = vadd.f32 %v329, %v486
        %v572 = vadd.f32 %v330, %v489
        %v573 = vadd.f32 %v331, %v491
        %v574 = vadd.f32 %v332, %v494
        %v575 = vadd.f32 %v333, %v496
        %v576 = vadd.f32 %v334, %v499
        %v577 = vadd.f32 %v335, %v501
        %v578 = vadd.f32 %v336, %v504
        %v579 = vadd.f32 %v337, %v506
        %v580 = vadd.f32 %v338, %v509
        %v581 = vadd.f32 %v339, %v511
        %v582 = vadd.f32 %v340, %v514
        %v583 = vadd.f32 %v341, %v516
        %v584 = vadd.f32 %v342, %v519
        %v585 = vadd.f32 %v343, %v521
        %v586 = vperm.slane %v261, 2
        %v587 = vmul.f32 %v207, %v586
        %v588 = vmul.f32 %v208, %v586
        %v589 = vmul.f32 %v209, %v586
        %v590 = vmul.f32 %v210, %v586
        %v591 = vmul.f32 %v211, %v586
        %v592 = vmul.f32 %v212, %v586
        %v593 = vmul.f32 %v213, %v586
        %v594 = vmul.f32 %v214, %v586
        %v595 = vmul.f32 %v215, %v586
        %v596 = vmul.f32 %v216, %v586
        %v597 = vmul.f32 %v217, %v586
        %v598 = vmul.f32 %v218, %v586
        %v599 = vmul.f32 %v219, %v586
        %v600 = vmul.f32 %v220, %v586
        %v601 = vmul.f32 %v221, %v586
        %v602 = vmul.f32 %v222, %v586
        %v603 = vmul.f32 %v223, %v586
        %v604 = vmul.f32 %v224, %v586
        %v605 = vmul.f32 %v225, %v586
        %v606 = vmul.f32 %v226, %v586
        %v607 = vmul.f32 %v227, %v586
        %v608 = vmul.f32 %v228, %v586
        %v609 = vmul.f32 %v229, %v586
        %v610 = vmul.f32 %v230, %v586
        %v611 = vmul.f32 %v231, %v586
        %v612 = vmul.f32 %v232, %v586
        %v613 = vmul.f32 %v233, %v586
        %v614 = vmul.f32 %v234, %v586
        %v615 = vmul.f32 %v235, %v586
        %v616 = vmul.f32 %v236, %v586
        %v617 = vmul.f32 %v237, %v586
        %v618 = vmul.f32 %v238, %v586
        %v619 = vmul.f32 %v239, %v586
        %v620 = vmul.f32 %v240, %v586
        %v621 = vmul.f32 %v241, %v586
        %v622 = vmul.f32 %v242, %v586
        %v623 = vmul.f32 %v243, %v586
        %v624 = vmul.f32 %v244, %v586
        %v625 = vmul.f32 %v245, %v586
        %v626 = vmul.f32 %v246, %v586
        %v627 = vmul.f32 %v247, %v586
        %v628 = vmul.f32 %v248, %v586
        %v629 = vmul.f32 %v249, %v586
        %v630 = vmul.f32 %v250, %v586
        %v631 = vmul.f32 %v251, %v586
        %v632 = vmul.f32 %v252, %v586
        %v633 = vmul.f32 %v253, %v586
        %v634 = vmul.f32 %v254, %v586
        %vm683 = vcmask 1045504
        %v684 = vrot.slane %v587, 2
        %v685 = vrot.slane %v588, 2
        %v686 = vsel %vm683, %v684, %v685
        %v687 = vrot.slane %v589, 2
        %v688 = vsel %vm683, %v685, %v687
        %v689 = vrot.slane %v590, 2
        %v690 = vrot.slane %v591, 2
        %v691 = vsel %vm683, %v689, %v690
        %v692 = vrot.slane %v592, 2
        %v693 = vsel %vm683, %v690, %v692
        %v694 = vrot.slane %v593, 2
        %v695 = vrot.slane %v594, 2
        %v696 = vsel %vm683, %v694, %v695
        %v697 = vrot.slane %v595, 2
        %v698 = vsel %vm683, %v695, %v697
        %v699 = vrot.slane %v596, 2
        %v700 = vrot.slane %v597, 2
        %v701 = vsel %vm683, %v699, %v700
        %v702 = vrot.slane %v598, 2
        %v703 = vsel %vm683, %v700, %v702
        %v704 = vrot.slane %v599, 2
        %v705 = vrot.slane %v600, 2
        %v706 = vsel %vm683, %v704, %v705
        %v707 = vrot.slane %v601, 2
        %v708 = vsel %vm683, %v705, %v707
        %v709 = vrot.slane %v602, 2
        %v710 = vrot.slane %v603, 2
        %v711 = vsel %vm683, %v709, %v710
        %v712 = vrot.slane %v604, 2
        %v713 = vsel %vm683, %v710, %v712
        %v714 = vrot.slane %v605, 2
        %v715 = vrot.slane %v606, 2
        %v716 = vsel %vm683, %v714, %v715
        %v717 = vrot.slane %v607, 2
        %v718 = vsel %vm683, %v715, %v717
        %v719 = vrot.slane %v608, 2
        %v720 = vrot.slane %v609, 2
        %v721 = vsel %vm683, %v719, %v720
        %v722 = vrot.slane %v610, 2
        %v723 = vsel %vm683, %v720, %v722
        %v724 = vrot.slane %v611, 2
        %v725 = vrot.slane %v612, 2
        %v726 = vsel %vm683, %v724, %v725
        %v727 = vrot.slane %v613, 2
        %v728 = vsel %vm683, %v725, %v727
        %v729 = vrot.slane %v614, 2
        %v730 = vrot.slane %v615, 2
        %v731 = vsel %vm683, %v729, %v730
        %v732 = vrot.slane %v616, 2
        %v733 = vsel %vm683, %v730, %v732
        %v734 = vrot.slane %v617, 2
        %v735 = vrot.slane %v618, 2
        %v736 = vsel %vm683, %v734, %v735
        %v737 = vrot.slane %v619, 2
        %v738 = vsel %vm683, %v735, %v737
        %v739 = vrot.slane %v620, 2
        %v740 = vrot.slane %v621, 2
        %v741 = vsel %vm683, %v739, %v740
        %v742 = vrot.slane %v622, 2
        %v743 = vsel %vm683, %v740, %v742
        %v744 = vrot.slane %v623, 2
        %v745 = vrot.slane %v624, 2
        %v746 = vsel %vm683, %v744, %v745
        %v747 = vrot.slane %v625, 2
        %v748 = vsel %vm683, %v745, %v747
        %v749 = vrot.slane %v626, 2
        %v750 = vrot.slane %v627, 2
        %v751 = vsel %vm683, %v749, %v750
        %v752 = vrot.slane %v628, 2
        %v753 = vsel %vm683, %v750, %v752
        %v754 = vrot.slane %v629, 2
        %v755 = vrot.slane %v630, 2
        %v756 = vsel %vm683, %v754, %v755
        %v757 = vrot.slane %v631, 2
        %v758 = vsel %vm683, %v755, %v757
        %v759 = vrot.slane %v632, 2
        %v760 = vrot.slane %v633, 2
        %v761 = vsel %vm683, %v759, %v760
        %v762 = vrot.slane %v634, 2
        %v763 = vsel %vm683, %v760, %v762
        %v796 = vadd.f32 %v554, %v686
        %v797 = vadd.f32 %v555, %v688
        %v798 = vadd.f32 %v556, %v691
        %v799 = vadd.f32 %v557, %v693
        %v800 = vadd.f32 %v558, %v696
        %v801 = vadd.f32 %v559, %v698
        %v802 = vadd.f32 %v560, %v701
        %v803 = vadd.f32 %v561, %v703
        %v804 = vadd.f32 %v562, %v706
        %v805 = vadd.f32 %v563, %v708
        %v806 = vadd.f32 %v564, %v711
        %v807 = vadd.f32 %v565, %v713
        %v808 = vadd.f32 %v566, %v716
        %v809 = vadd.f32 %v567, %v718
        %v810 = vadd.f32 %v568, %v721
        %v811 = vadd.f32 %v569, %v723
        %v812 = vadd.f32 %v570, %v726
        %v813 = vadd.f32 %v571, %v728
        %v814 = vadd.f32 %v572, %v731
        %v815 = vadd.f32 %v573, %v733
        %v816 = vadd.f32 %v574, %v736
        %v817 = vadd.f32 %v575, %v738
        %v818 = vadd.f32 %v576, %v741
        %v819 = vadd.f32 %v577, %v743
        %v820 = vadd.f32 %v578, %v746
        %v821 = vadd.f32 %v579, %v748
        %v822 = vadd.f32 %v580, %v751
        %v823 = vadd.f32 %v581, %v753
        %v824 = vadd.f32 %v582, %v756
        %v825 = vadd.f32 %v583, %v758
        %v826 = vadd.f32 %v584, %v761
        %v827 = vadd.f32 %v585, %v763
        %v828 = vperm.slane %v261, 3
        %v829 = vmul.f32 %v210, %v828
        %v830 = vmul.f32 %v211, %v828
        %v831 = vmul.f32 %v213, %v828
        %v832 = vmul.f32 %v214, %v828
        %v833 = vmul.f32 %v216, %v828
        %v834 = vmul.f32 %v217, %v828
        %v835 = vmul.f32 %v219, %v828
        %v836 = vmul.f32 %v220, %v828
        %v837 = vmul.f32 %v222, %v828
        %v838 = vmul.f32 %v223, %v828
        %v839 = vmul.f32 %v225, %v828
        %v840 = vmul.f32 %v226, %v828
        %v841 = vmul.f32 %v228, %v828
        %v842 = vmul.f32 %v229, %v828
        %v843 = vmul.f32 %v231, %v828
        %v844 = vmul.f32 %v232, %v828
        %v845 = vmul.f32 %v234, %v828
        %v846 = vmul.f32 %v235, %v828
        %v847 = vmul.f32 %v237, %v828
        %v848 = vmul.f32 %v238, %v828
        %v849 = vmul.f32 %v240, %v828
        %v850 = vmul.f32 %v241, %v828
        %v851 = vmul.f32 %v243, %v828
        %v852 = vmul.f32 %v244, %v828
        %v853 = vmul.f32 %v246, %v828
        %v854 = vmul.f32 %v247, %v828
        %v855 = vmul.f32 %v249, %v828
        %v856 = vmul.f32 %v250, %v828
        %v857 = vmul.f32 %v252, %v828
        %v858 = vmul.f32 %v253, %v828
        %v859 = vmul.f32 %v255, %v828
        %v860 = vmul.f32 %v256, %v828
        %v861 = vadd.f32 %v796, %v829
        %v862 = vadd.f32 %v797, %v830
        %v863 = vadd.f32 %v798, %v831
        %v864 = vadd.f32 %v799, %v832
        %v865 = vadd.f32 %v800, %v833
        %v866 = vadd.f32 %v801, %v834
        %v867 = vadd.f32 %v802, %v835
        %v868 = vadd.f32 %v803, %v836
        %v869 = vadd.f32 %v804, %v837
        %v870 = vadd.f32 %v805, %v838
        %v871 = vadd.f32 %v806, %v839
        %v872 = vadd.f32 %v807, %v840
        %v873 = vadd.f32 %v808, %v841
        %v874 = vadd.f32 %v809, %v842
        %v875 = vadd.f32 %v810, %v843
        %v876 = vadd.f32 %v811, %v844
        %v877 = vadd.f32 %v812, %v845
        %v878 = vadd.f32 %v813, %v846
        %v879 = vadd.f32 %v814, %v847
        %v880 = vadd.f32 %v815, %v848
        %v881 = vadd.f32 %v816, %v849
        %v882 = vadd.f32 %v817, %v850
        %v883 = vadd.f32 %v818, %v851
        %v884 = vadd.f32 %v819, %v852
        %v885 = vadd.f32 %v820, %v853
        %v886 = vadd.f32 %v821, %v854
        %v887 = vadd.f32 %v822, %v855
        %v888 = vadd.f32 %v823, %v856
        %v889 = vadd.f32 %v824, %v857
        %v890 = vadd.f32 %v825, %v858
        %v891 = vadd.f32 %v826, %v859
        %v892 = vadd.f32 %v827, %v860
        %v893 = vperm.slane %v261, 4
        %v894 = vmul.f32 %v210, %v893
        %v895 = vmul.f32 %v211, %v893
        %v896 = vmul.f32 %v212, %v893
        %v897 = vmul.f32 %v213, %v893
        %v898 = vmul.f32 %v214, %v893
        %v899 = vmul.f32 %v215, %v893
        %v900 = vmul.f32 %v216, %v893
        %v901 = vmul.f32 %v217, %v893
        %v902 = vmul.f32 %v218, %v893
        %v903 = vmul.f32 %v219, %v893
        %v904 = vmul.f32 %v220, %v893
        %v905 = vmul.f32 %v221, %v893
        %v906 = vmul.f32 %v222, %v893
        %v907 = vmul.f32 %v223, %v893
        %v908 = vmul.f32 %v224, %v893
        %v909 = vmul.f32 %v225, %v893
        %v910 = vmul.f32 %v226, %v893
        %v911 = vmul.f32 %v227, %v893
        %v912 = vmul.f32 %v228, %v893
        %v913 = vmul.f32 %v229, %v893
        %v914 = vmul.f32 %v230, %v893
        %v915 = vmul.f32 %v231, %v893
        %v916 = vmul.f32 %v232, %v893
        %v917 = vmul.f32 %v233, %v893
        %v918 = vmul.f32 %v234, %v893
        %v919 = vmul.f32 %v235, %v893
        %v920 = vmul.f32 %v236, %v893
        %v921 = vmul.f32 %v237, %v893
        %v922 = vmul.f32 %v238, %v893
        %v923 = vmul.f32 %v239, %v893
        %v924 = vmul.f32 %v240, %v893
        %v925 = vmul.f32 %v241, %v893
        %v926 = vmul.f32 %v242, %v893
        %v927 = vmul.f32 %v243, %v893
        %v928 = vmul.f32 %v244, %v893
        %v929 = vmul.f32 %v245, %v893
        %v930 = vmul.f32 %v246, %v893
        %v931 = vmul.f32 %v247, %v893
        %v932 = vmul.f32 %v248, %v893
        %v933 = vmul.f32 %v249, %v893
        %v934 = vmul.f32 %v250, %v893
        %v935 = vmul.f32 %v251, %v893
        %v936 = vmul.f32 %v252, %v893
        %v937 = vmul.f32 %v253, %v893
        %v938 = vmul.f32 %v254, %v893
        %v939 = vmul.f32 %v255, %v893
        %v940 = vmul.f32 %v256, %v893
        %v941 = vmul.f32 %v257, %v893
        %v990 = vrot.slane %v894, 1
        %v991 = vrot.slane %v895, 1
        %v992 = vsel %vm441, %v990, %v991
        %v993 = vrot.slane %v896, 1
        %v994 = vsel %vm441, %v991, %v993
        %v995 = vrot.slane %v897, 1
        %v996 = vrot.slane %v898, 1
        %v997 = vsel %vm441, %v995, %v996
        %v998 = vrot.slane %v899, 1
        %v999 = vsel %vm441, %v996, %v998
        %v1000 = vrot.slane %v900, 1
        %v1001 = vrot.slane %v901, 1
        %v1002 = vsel %vm441, %v1000, %v1001
        %v1003 = vrot.slane %v902, 1
        %v1004 = vsel %vm441, %v1001, %v1003
        %v1005 = vrot.slane %v903, 1
        %v1006 = vrot.slane %v904, 1
        %v1007 = vsel %vm441, %v1005, %v1006
        %v1008 = vrot.slane %v905, 1
        %v1009 = vsel %vm441, %v1006, %v1008
        %v1010 = vrot.slane %v906, 1
        %v1011 = vrot.slane %v907, 1
        %v1012 = vsel %vm441, %v1010, %v1011
        %v1013 = vrot.slane %v908, 1
        %v1014 = vsel %vm441, %v1011, %v1013
        %v1015 = vrot.slane %v909, 1
        %v1016 = vrot.slane %v910, 1
        %v1017 = vsel %vm441, %v1015, %v1016
        %v1018 = vrot.slane %v911, 1
        %v1019 = vsel %vm441, %v1016, %v1018
        %v1020 = vrot.slane %v912, 1
        %v1021 = vrot.slane %v913, 1
        %v1022 = vsel %vm441, %v1020, %v1021
        %v1023 = vrot.slane %v914, 1
        %v1024 = vsel %vm441, %v1021, %v1023
        %v1025 = vrot.slane %v915, 1
        %v1026 = vrot.slane %v916, 1
        %v1027 = vsel %vm441, %v1025, %v1026
        %v1028 = vrot.slane %v917, 1
        %v1029 = vsel %vm441, %v1026, %v1028
        %v1030 = vrot.slane %v918, 1
        %v1031 = vrot.slane %v919, 1
        %v1032 = vsel %vm441, %v1030, %v1031
        %v1033 = vrot.slane %v920, 1
        %v1034 = vsel %vm441, %v1031, %v1033
        %v1035 = vrot.slane %v921, 1
        %v1036 = vrot.slane %v922, 1
        %v1037 = vsel %vm441, %v1035, %v1036
        %v1038 = vrot.slane %v923, 1
        %v1039 = vsel %vm441, %v1036, %v1038
        %v1040 = vrot.slane %v924, 1
        %v1041 = vrot.slane %v925, 1
        %v1042 = vsel %vm441, %v1040, %v1041
        %v1043 = vrot.slane %v926, 1
        %v1044 = vsel %vm441, %v1041, %v1043
        %v1045 = vrot.slane %v927, 1
        %v1046 = vrot.slane %v928, 1
        %v1047 = vsel %vm441, %v1045, %v1046
        %v1048 = vrot.slane %v929, 1
        %v1049 = vsel %vm441, %v1046, %v1048
        %v1050 = vrot.slane %v930, 1
        %v1051 = vrot.slane %v931, 1
        %v1052 = vsel %vm441, %v1050, %v1051
        %v1053 = vrot.slane %v932, 1
        %v1054 = vsel %vm441, %v1051, %v1053
        %v1055 = vrot.slane %v933, 1
        %v1056 = vrot.slane %v934, 1
        %v1057 = vsel %vm441, %v1055, %v1056
        %v1058 = vrot.slane %v935, 1
        %v1059 = vsel %vm441, %v1056, %v1058
        %v1060 = vrot.slane %v936, 1
        %v1061 = vrot.slane %v937, 1
        %v1062 = vsel %vm441, %v1060, %v1061
        %v1063 = vrot.slane %v938, 1
        %v1064 = vsel %vm441, %v1061, %v1063
        %v1065 = vrot.slane %v939, 1
        %v1066 = vrot.slane %v940, 1
        %v1067 = vsel %vm441, %v1065, %v1066
        %v1068 = vrot.slane %v941, 1
        %v1069 = vsel %vm441, %v1066, %v1068
        %v1102 = vadd.f32 %v861, %v992
        %v1103 = vadd.f32 %v862, %v994
        %v1104 = vadd.f32 %v863, %v997
        %v1105 = vadd.f32 %v864, %v999
        %v1106 = vadd.f32 %v865, %v1002
        %v1107 = vadd.f32 %v866, %v1004
        %v1108 = vadd.f32 %v867, %v1007
        %v1109 = vadd.f32 %v868, %v1009
        %v1110 = vadd.f32 %v869, %v1012
        %v1111 = vadd.f32 %v870, %v1014
        %v1112 = vadd.f32 %v871, %v1017
        %v1113 = vadd.f32 %v872, %v1019
        %v1114 = vadd.f32 %v873, %v1022
        %v1115 = vadd.f32 %v874, %v1024
        %v1116 = vadd.f32 %v875, %v1027
        %v1117 = vadd.f32 %v876, %v1029
        %v1118 = vadd.f32 %v877, %v1032
        %v1119 = vadd.f32 %v878, %v1034
        %v1120 = vadd.f32 %v879, %v1037
        %v1121 = vadd.f32 %v880, %v1039
        %v1122 = vadd.f32 %v881, %v1042
        %v1123 = vadd.f32 %v882, %v1044
        %v1124 = vadd.f32 %v883, %v1047
        %v1125 = vadd.f32 %v884, %v1049
        %v1126 = vadd.f32 %v885, %v1052
        %v1127 = vadd.f32 %v886, %v1054
        %v1128 = vadd.f32 %v887, %v1057
        %v1129 = vadd.f32 %v888, %v1059
        %v1130 = vadd.f32 %v889, %v1062
        %v1131 = vadd.f32 %v890, %v1064
        %v1132 = vadd.f32 %v891, %v1067
        %v1133 = vadd.f32 %v892, %v1069
        %v1134 = vperm.slane %v261, 5
        %v1135 = vmul.f32 %v210, %v1134
        %v1136 = vmul.f32 %v211, %v1134
        %v1137 = vmul.f32 %v212, %v1134
        %v1138 = vmul.f32 %v213, %v1134
        %v1139 = vmul.f32 %v214, %v1134
        %v1140 = vmul.f32 %v215, %v1134
        %v1141 = vmul.f32 %v216, %v1134
        %v1142 = vmul.f32 %v217, %v1134
        %v1143 = vmul.f32 %v218, %v1134
        %v1144 = vmul.f32 %v219, %v1134
        %v1145 = vmul.f32 %v220, %v1134
        %v1146 = vmul.f32 %v221, %v1134
        %v1147 = vmul.f32 %v222, %v1134
        %v1148 = vmul.f32 %v223, %v1134
        %v1149 = vmul.f32 %v224, %v1134
        %v1150 = vmul.f32 %v225, %v1134
        %v1151 = vmul.f32 %v226, %v1134
        %v1152 = vmul.f32 %v227, %v1134
        %v1153 = vmul.f32 %v228, %v1134
        %v1154 = vmul.f32 %v229, %v1134
        %v1155 = vmul.f32 %v230, %v1134
        %v1156 = vmul.f32 %v231, %v1134
        %v1157 = vmul.f32 %v232, %v1134
        %v1158 = vmul.f32 %v233, %v1134
        %v1159 = vmul.f32 %v234, %v1134
        %v1160 = vmul.f32 %v235, %v1134
        %v1161 = vmul.f32 %v236, %v1134
        %v1162 = vmul.f32 %v237, %v1134
        %v1163 = vmul.f32 %v238, %v1134
        %v1164 = vmul.f32 %v239, %v1134
        %v1165 = vmul.f32 %v240, %v1134
        %v1166 = vmul.f32 %v241, %v1134
        %v1167 = vmul.f32 %v242, %v1134
        %v1168 = vmul.f32 %v243, %v1134
        %v1169 = vmul.f32 %v244, %v1134
        %v1170 = vmul.f32 %v245, %v1134
        %v1171 = vmul.f32 %v246, %v1134
        %v1172 = vmul.f32 %v247, %v1134
        %v1173 = vmul.f32 %v248, %v1134
        %v1174 = vmul.f32 %v249, %v1134
        %v1175 = vmul.f32 %v250, %v1134
        %v1176 = vmul.f32 %v251, %v1134
        %v1177 = vmul.f32 %v252, %v1134
        %v1178 = vmul.f32 %v253, %v1134
        %v1179 = vmul.f32 %v254, %v1134
        %v1180 = vmul.f32 %v255, %v1134
        %v1181 = vmul.f32 %v256, %v1134
        %v1182 = vmul.f32 %v257, %v1134
        %v1231 = vrot.slane %v1135, 2
        %v1232 = vrot.slane %v1136, 2
        %v1233 = vsel %vm683, %v1231, %v1232
        %v1234 = vrot.slane %v1137, 2
        %v1235 = vsel %vm683, %v1232, %v1234
        %v1236 = vrot.slane %v1138, 2
        %v1237 = vrot.slane %v1139, 2
        %v1238 = vsel %vm683, %v1236, %v1237
        %v1239 = vrot.slane %v1140, 2
        %v1240 = vsel %vm683, %v1237, %v1239
        %v1241 = vrot.slane %v1141, 2
        %v1242 = vrot.slane %v1142, 2
        %v1243 = vsel %vm683, %v1241, %v1242
        %v1244 = vrot.slane %v1143, 2
        %v1245 = vsel %vm683, %v1242, %v1244
        %v1246 = vrot.slane %v1144, 2
        %v1247 = vrot.slane %v1145, 2
        %v1248 = vsel %vm683, %v1246, %v1247
        %v1249 = vrot.slane %v1146, 2
        %v1250 = vsel %vm683, %v1247, %v1249
        %v1251 = vrot.slane %v1147, 2
        %v1252 = vrot.slane %v1148, 2
        %v1253 = vsel %vm683, %v1251, %v1252
        %v1254 = vrot.slane %v1149, 2
        %v1255 = vsel %vm683, %v1252, %v1254
        %v1256 = vrot.slane %v1150, 2
        %v1257 = vrot.slane %v1151, 2
        %v1258 = vsel %vm683, %v1256, %v1257
        %v1259 = vrot.slane %v1152, 2
        %v1260 = vsel %vm683, %v1257, %v1259
        %v1261 = vrot.slane %v1153, 2
        %v1262 = vrot.slane %v1154, 2
        %v1263 = vsel %vm683, %v1261, %v1262
        %v1264 = vrot.slane %v1155, 2
        %v1265 = vsel %vm683, %v1262, %v1264
        %v1266 = vrot.slane %v1156, 2
        %v1267 = vrot.slane %v1157, 2
        %v1268 = vsel %vm683, %v1266, %v1267
        %v1269 = vrot.slane %v1158, 2
        %v1270 = vsel %vm683, %v1267, %v1269
        %v1271 = vrot.slane %v1159, 2
        %v1272 = vrot.slane %v1160, 2
        %v1273 = vsel %vm683, %v1271, %v1272
        %v1274 = vrot.slane %v1161, 2
        %v1275 = vsel %vm683, %v1272, %v1274
        %v1276 = vrot.slane %v1162, 2
        %v1277 = vrot.slane %v1163, 2
        %v1278 = vsel %vm683, %v1276, %v1277
        %v1279 = vrot.slane %v1164, 2
        %v1280 = vsel %vm683, %v1277, %v1279
        %v1281 = vrot.slane %v1165, 2
        %v1282 = vrot.slane %v1166, 2
        %v1283 = vsel %vm683, %v1281, %v1282
        %v1284 = vrot.slane %v1167, 2
        %v1285 = vsel %vm683, %v1282, %v1284
        %v1286 = vrot.slane %v1168, 2
        %v1287 = vrot.slane %v1169, 2
        %v1288 = vsel %vm683, %v1286, %v1287
        %v1289 = vrot.slane %v1170, 2
        %v1290 = vsel %vm683, %v1287, %v1289
        %v1291 = vrot.slane %v1171, 2
        %v1292 = vrot.slane %v1172, 2
        %v1293 = vsel %vm683, %v1291, %v1292
        %v1294 = vrot.slane %v1173, 2
        %v1295 = vsel %vm683, %v1292, %v1294
        %v1296 = vrot.slane %v1174, 2
        %v1297 = vrot.slane %v1175, 2
        %v1298 = vsel %vm683, %v1296, %v1297
        %v1299 = vrot.slane %v1176, 2
        %v1300 = vsel %vm683, %v1297, %v1299
        %v1301 = vrot.slane %v1177, 2
        %v1302 = vrot.slane %v1178, 2
        %v1303 = vsel %vm683, %v1301, %v1302
        %v1304 = vrot.slane %v1179, 2
        %v1305 = vsel %vm683, %v1302, %v1304
        %v1306 = vrot.slane %v1180, 2
        %v1307 = vrot.slane %v1181, 2
        %v1308 = vsel %vm683, %v1306, %v1307
        %v1309 = vrot.slane %v1182, 2
        %v1310 = vsel %vm683, %v1307, %v1309
        %v1343 = vadd.f32 %v1102, %v1233
        %v1344 = vadd.f32 %v1103, %v1235
        %v1345 = vadd.f32 %v1104, %v1238
        %v1346 = vadd.f32 %v1105, %v1240
        %v1347 = vadd.f32 %v1106, %v1243
        %v1348 = vadd.f32 %v1107, %v1245
        %v1349 = vadd.f32 %v1108, %v1248
        %v1350 = vadd.f32 %v1109, %v1250
        %v1351 = vadd.f32 %v1110, %v1253
        %v1352 = vadd.f32 %v1111, %v1255
        %v1353 = vadd.f32 %v1112, %v1258
        %v1354 = vadd.f32 %v1113, %v1260
        %v1355 = vadd.f32 %v1114, %v1263
        %v1356 = vadd.f32 %v1115, %v1265
        %v1357 = vadd.f32 %v1116, %v1268
        %v1358 = vadd.f32 %v1117, %v1270
        %v1359 = vadd.f32 %v1118, %v1273
        %v1360 = vadd.f32 %v1119, %v1275
        %v1361 = vadd.f32 %v1120, %v1278
        %v1362 = vadd.f32 %v1121, %v1280
        %v1363 = vadd.f32 %v1122, %v1283
        %v1364 = vadd.f32 %v1123, %v1285
        %v1365 = vadd.f32 %v1124, %v1288
        %v1366 = vadd.f32 %v1125, %v1290
        %v1367 = vadd.f32 %v1126, %v1293
        %v1368 = vadd.f32 %v1127, %v1295
        %v1369 = vadd.f32 %v1128, %v1298
        %v1370 = vadd.f32 %v1129, %v1300
        %v1371 = vadd.f32 %v1130, %v1303
        %v1372 = vadd.f32 %v1131, %v1305
        %v1373 = vadd.f32 %v1132, %v1308
        %v1374 = vadd.f32 %v1133, %v1310
        %v1375 = vperm.slane %v261, 6
        %v1376 = vmul.f32 %v213, %v1375
        %v1377 = vmul.f32 %v214, %v1375
        %v1378 = vmul.f32 %v216, %v1375
        %v1379 = vmul.f32 %v217, %v1375
        %v1380 = vmul.f32 %v219, %v1375
        %v1381 = vmul.f32 %v220, %v1375
        %v1382 = vmul.f32 %v222, %v1375
        %v1383 = vmul.f32 %v223, %v1375
        %v1384 = vmul.f32 %v225, %v1375
        %v1385 = vmul.f32 %v226, %v1375
        %v1386 = vmul.f32 %v228, %v1375
        %v1387 = vmul.f32 %v229, %v1375
        %v1388 = vmul.f32 %v231, %v1375
        %v1389 = vmul.f32 %v232, %v1375
        %v1390 = vmul.f32 %v234, %v1375
        %v1391 = vmul.f32 %v235, %v1375
        %v1392 = vmul.f32 %v237, %v1375
        %v1393 = vmul.f32 %v238, %v1375
        %v1394 = vmul.f32 %v240, %v1375
        %v1395 = vmul.f32 %v241, %v1375
        %v1396 = vmul.f32 %v243, %v1375
        %v1397 = vmul.f32 %v244, %v1375
        %v1398 = vmul.f32 %v246, %v1375
        %v1399 = vmul.f32 %v247, %v1375
        %v1400 = vmul.f32 %v249, %v1375
        %v1401 = vmul.f32 %v250, %v1375
        %v1402 = vmul.f32 %v252, %v1375
        %v1403 = vmul.f32 %v253, %v1375
        %v1404 = vmul.f32 %v255, %v1375
        %v1405 = vmul.f32 %v256, %v1375
        %v1406 = vmul.f32 %v258, %v1375
        %v1407 = vmul.f32 %v259, %v1375
        %v1408 = vadd.f32 %v1343, %v1376
        %v1409 = vadd.f32 %v1344, %v1377
        %v1410 = vadd.f32 %v1345, %v1378
        %v1411 = vadd.f32 %v1346, %v1379
        %v1412 = vadd.f32 %v1347, %v1380
        %v1413 = vadd.f32 %v1348, %v1381
        %v1414 = vadd.f32 %v1349, %v1382
        %v1415 = vadd.f32 %v1350, %v1383
        %v1416 = vadd.f32 %v1351, %v1384
        %v1417 = vadd.f32 %v1352, %v1385
        %v1418 = vadd.f32 %v1353, %v1386
        %v1419 = vadd.f32 %v1354, %v1387
        %v1420 = vadd.f32 %v1355, %v1388
        %v1421 = vadd.f32 %v1356, %v1389
        %v1422 = vadd.f32 %v1357, %v1390
        %v1423 = vadd.f32 %v1358, %v1391
        %v1424 = vadd.f32 %v1359, %v1392
        %v1425 = vadd.f32 %v1360, %v1393
        %v1426 = vadd.f32 %v1361, %v1394
        %v1427 = vadd.f32 %v1362, %v1395
        %v1428 = vadd.f32 %v1363, %v1396
        %v1429 = vadd.f32 %v1364, %v1397
        %v1430 = vadd.f32 %v1365, %v1398
        %v1431 = vadd.f32 %v1366, %v1399
        %v1432 = vadd.f32 %v1367, %v1400
        %v1433 = vadd.f32 %v1368, %v1401
        %v1434 = vadd.f32 %v1369, %v1402
        %v1435 = vadd.f32 %v1370, %v1403
        %v1436 = vadd.f32 %v1371, %v1404
        %v1437 = vadd.f32 %v1372, %v1405
        %v1438 = vadd.f32 %v1373, %v1406
        %v1439 = vadd.f32 %v1374, %v1407
        %v1440 = vperm.slane %v261, 7
        %v1441 = vmul.f32 %v213, %v1440
        %v1442 = vmul.f32 %v214, %v1440
        %v1443 = vmul.f32 %v215, %v1440
        %v1444 = vmul.f32 %v216, %v1440
        %v1445 = vmul.f32 %v217, %v1440
        %v1446 = vmul.f32 %v218, %v1440
        %v1447 = vmul.f32 %v219, %v1440
        %v1448 = vmul.f32 %v220, %v1440
        %v1449 = vmul.f32 %v221, %v1440
        %v1450 = vmul.f32 %v222, %v1440
        %v1451 = vmul.f32 %v223, %v1440
        %v1452 = vmul.f32 %v224, %v1440
        %v1453 = vmul.f32 %v225, %v1440
        %v1454 = vmul.f32 %v226, %v1440
        %v1455 = vmul.f32 %v227, %v1440
        %v1456 = vmul.f32 %v228, %v1440
        %v1457 = vmul.f32 %v229, %v1440
        %v1458 = vmul.f32 %v230, %v1440
        %v1459 = vmul.f32 %v231, %v1440
        %v1460 = vmul.f32 %v232, %v1440
        %v1461 = vmul.f32 %v233, %v1440
        %v1462 = vmul.f32 %v234, %v1440
        %v1463 = vmul.f32 %v235, %v1440
        %v1464 = vmul.f32 %v236, %v1440
        %v1465 = vmul.f32 %v237, %v1440
        %v1466 = vmul.f32 %v238, %v1440
        %v1467 = vmul.f32 %v239, %v1440
        %v1468 = vmul.f32 %v240, %v1440
        %v1469 = vmul.f32 %v241, %v1440
        %v1470 = vmul.f32 %v242, %v1440
        %v1471 = vmul.f32 %v243, %v1440
        %v1472 = vmul.f32 %v244, %v1440
        %v1473 = vmul.f32 %v245, %v1440
        %v1474 = vmul.f32 %v246, %v1440
        %v1475 = vmul.f32 %v247, %v1440
        %v1476 = vmul.f32 %v248, %v1440
        %v1477 = vmul.f32 %v249, %v1440
        %v1478 = vmul.f32 %v250, %v1440
        %v1479 = vmul.f32 %v251, %v1440
        %v1480 = vmul.f32 %v252, %v1440
        %v1481 = vmul.f32 %v253, %v1440
        %v1482 = vmul.f32 %v254, %v1440
        %v1483 = vmul.f32 %v255, %v1440
        %v1484 = vmul.f32 %v256, %v1440
        %v1485 = vmul.f32 %v257, %v1440
        %v1486 = vmul.f32 %v258, %v1440
        %v1487 = vmul.f32 %v259, %v1440
        %v1488 = vmul.f32 %v260, %v1440
        %v1537 = vrot.slane %v1441, 1
        %v1538 = vrot.slane %v1442, 1
        %v1539 = vsel %vm441, %v1537, %v1538
        %v1540 = vrot.slane %v1443, 1
        %v1541 = vsel %vm441, %v1538, %v1540
        %v1542 = vrot.slane %v1444, 1
        %v1543 = vrot.slane %v1445, 1
        %v1544 = vsel %vm441, %v1542, %v1543
        %v1545 = vrot.slane %v1446, 1
        %v1546 = vsel %vm441, %v1543, %v1545
        %v1547 = vrot.slane %v1447, 1
        %v1548 = vrot.slane %v1448, 1
        %v1549 = vsel %vm441, %v1547, %v1548
        %v1550 = vrot.slane %v1449, 1
        %v1551 = vsel %vm441, %v1548, %v1550
        %v1552 = vrot.slane %v1450, 1
        %v1553 = vrot.slane %v1451, 1
        %v1554 = vsel %vm441, %v1552, %v1553
        %v1555 = vrot.slane %v1452, 1
        %v1556 = vsel %vm441, %v1553, %v1555
        %v1557 = vrot.slane %v1453, 1
        %v1558 = vrot.slane %v1454, 1
        %v1559 = vsel %vm441, %v1557, %v1558
        %v1560 = vrot.slane %v1455, 1
        %v1561 = vsel %vm441, %v1558, %v1560
        %v1562 = vrot.slane %v1456, 1
        %v1563 = vrot.slane %v1457, 1
        %v1564 = vsel %vm441, %v1562, %v1563
        %v1565 = vrot.slane %v1458, 1
        %v1566 = vsel %vm441, %v1563, %v1565
        %v1567 = vrot.slane %v1459, 1
        %v1568 = vrot.slane %v1460, 1
        %v1569 = vsel %vm441, %v1567, %v1568
        %v1570 = vrot.slane %v1461, 1
        %v1571 = vsel %vm441, %v1568, %v1570
        %v1572 = vrot.slane %v1462, 1
        %v1573 = vrot.slane %v1463, 1
        %v1574 = vsel %vm441, %v1572, %v1573
        %v1575 = vrot.slane %v1464, 1
        %v1576 = vsel %vm441, %v1573, %v1575
        %v1577 = vrot.slane %v1465, 1
        %v1578 = vrot.slane %v1466, 1
        %v1579 = vsel %vm441, %v1577, %v1578
        %v1580 = vrot.slane %v1467, 1
        %v1581 = vsel %vm441, %v1578, %v1580
        %v1582 = vrot.slane %v1468, 1
        %v1583 = vrot.slane %v1469, 1
        %v1584 = vsel %vm441, %v1582, %v1583
        %v1585 = vrot.slane %v1470, 1
        %v1586 = vsel %vm441, %v1583, %v1585
        %v1587 = vrot.slane %v1471, 1
        %v1588 = vrot.slane %v1472, 1
        %v1589 = vsel %vm441, %v1587, %v1588
        %v1590 = vrot.slane %v1473, 1
        %v1591 = vsel %vm441, %v1588, %v1590
        %v1592 = vrot.slane %v1474, 1
        %v1593 = vrot.slane %v1475, 1
        %v1594 = vsel %vm441, %v1592, %v1593
        %v1595 = vrot.slane %v1476, 1
        %v1596 = vsel %vm441, %v1593, %v1595
        %v1597 = vrot.slane %v1477, 1
        %v1598 = vrot.slane %v1478, 1
        %v1599 = vsel %vm441, %v1597, %v1598
        %v1600 = vrot.slane %v1479, 1
        %v1601 = vsel %vm441, %v1598, %v1600
        %v1602 = vrot.slane %v1480, 1
        %v1603 = vrot.slane %v1481, 1
        %v1604 = vsel %vm441, %v1602, %v1603
        %v1605 = vrot.slane %v1482, 1
        %v1606 = vsel %vm441, %v1603, %v1605
        %v1607 = vrot.slane %v1483, 1
        %v1608 = vrot.slane %v1484, 1
        %v1609 = vsel %vm441, %v1607, %v1608
        %v1610 = vrot.slane %v1485, 1
        %v1611 = vsel %vm441, %v1608, %v1610
        %v1612 = vrot.slane %v1486, 1
        %v1613 = vrot.slane %v1487, 1
        %v1614 = vsel %vm441, %v1612, %v1613
        %v1615 = vrot.slane %v1488, 1
        %v1616 = vsel %vm441, %v1613, %v1615
        %v1649 = vadd.f32 %v1408, %v1539
        %v1650 = vadd.f32 %v1409, %v1541
        %v1651 = vadd.f32 %v1410, %v1544
        %v1652 = vadd.f32 %v1411, %v1546
        %v1653 = vadd.f32 %v1412, %v1549
        %v1654 = vadd.f32 %v1413, %v1551
        %v1655 = vadd.f32 %v1414, %v1554
        %v1656 = vadd.f32 %v1415, %v1556
        %v1657 = vadd.f32 %v1416, %v1559
        %v1658 = vadd.f32 %v1417, %v1561
        %v1659 = vadd.f32 %v1418, %v1564
        %v1660 = vadd.f32 %v1419, %v1566
        %v1661 = vadd.f32 %v1420, %v1569
        %v1662 = vadd.f32 %v1421, %v1571
        %v1663 = vadd.f32 %v1422, %v1574
        %v1664 = vadd.f32 %v1423, %v1576
        %v1665 = vadd.f32 %v1424, %v1579
        %v1666 = vadd.f32 %v1425, %v1581
        %v1667 = vadd.f32 %v1426, %v1584
        %v1668 = vadd.f32 %v1427, %v1586
        %v1669 = vadd.f32 %v1428, %v1589
        %v1670 = vadd.f32 %v1429, %v1591
        %v1671 = vadd.f32 %v1430, %v1594
        %v1672 = vadd.f32 %v1431, %v1596
        %v1673 = vadd.f32 %v1432, %v1599
        %v1674 = vadd.f32 %v1433, %v1601
        %v1675 = vadd.f32 %v1434, %v1604
        %v1676 = vadd.f32 %v1435, %v1606
        %v1677 = vadd.f32 %v1436, %v1609
        %v1678 = vadd.f32 %v1437, %v1611
        %v1679 = vadd.f32 %v1438, %v1614
        %v1680 = vadd.f32 %v1439, %v1616
        %v1681 = vperm.slane %v262, 0
        %v1682 = vmul.f32 %v213, %v1681
        %v1683 = vmul.f32 %v214, %v1681
        %v1684 = vmul.f32 %v215, %v1681
        %v1685 = vmul.f32 %v216, %v1681
        %v1686 = vmul.f32 %v217, %v1681
        %v1687 = vmul.f32 %v218, %v1681
        %v1688 = vmul.f32 %v219, %v1681
        %v1689 = vmul.f32 %v220, %v1681
        %v1690 = vmul.f32 %v221, %v1681
        %v1691 = vmul.f32 %v222, %v1681
        %v1692 = vmul.f32 %v223, %v1681
        %v1693 = vmul.f32 %v224, %v1681
        %v1694 = vmul.f32 %v225, %v1681
        %v1695 = vmul.f32 %v226, %v1681
        %v1696 = vmul.f32 %v227, %v1681
        %v1697 = vmul.f32 %v228, %v1681
        %v1698 = vmul.f32 %v229, %v1681
        %v1699 = vmul.f32 %v230, %v1681
        %v1700 = vmul.f32 %v231, %v1681
        %v1701 = vmul.f32 %v232, %v1681
        %v1702 = vmul.f32 %v233, %v1681
        %v1703 = vmul.f32 %v234, %v1681
        %v1704 = vmul.f32 %v235, %v1681
        %v1705 = vmul.f32 %v236, %v1681
        %v1706 = vmul.f32 %v237, %v1681
        %v1707 = vmul.f32 %v238, %v1681
        %v1708 = vmul.f32 %v239, %v1681
        %v1709 = vmul.f32 %v240, %v1681
        %v1710 = vmul.f32 %v241, %v1681
        %v1711 = vmul.f32 %v242, %v1681
        %v1712 = vmul.f32 %v243, %v1681
        %v1713 = vmul.f32 %v244, %v1681
        %v1714 = vmul.f32 %v245, %v1681
        %v1715 = vmul.f32 %v246, %v1681
        %v1716 = vmul.f32 %v247, %v1681
        %v1717 = vmul.f32 %v248, %v1681
        %v1718 = vmul.f32 %v249, %v1681
        %v1719 = vmul.f32 %v250, %v1681
        %v1720 = vmul.f32 %v251, %v1681
        %v1721 = vmul.f32 %v252, %v1681
        %v1722 = vmul.f32 %v253, %v1681
        %v1723 = vmul.f32 %v254, %v1681
        %v1724 = vmul.f32 %v255, %v1681
        %v1725 = vmul.f32 %v256, %v1681
        %v1726 = vmul.f32 %v257, %v1681
        %v1727 = vmul.f32 %v258, %v1681
        %v1728 = vmul.f32 %v259, %v1681
        %v1729 = vmul.f32 %v260, %v1681
        %v1778 = vrot.slane %v1682, 2
        %v1779 = vrot.slane %v1683, 2
        %v1780 = vsel %vm683, %v1778, %v1779
        %v1781 = vrot.slane %v1684, 2
        %v1782 = vsel %vm683, %v1779, %v1781
        %v1783 = vrot.slane %v1685, 2
        %v1784 = vrot.slane %v1686, 2
        %v1785 = vsel %vm683, %v1783, %v1784
        %v1786 = vrot.slane %v1687, 2
        %v1787 = vsel %vm683, %v1784, %v1786
        %v1788 = vrot.slane %v1688, 2
        %v1789 = vrot.slane %v1689, 2
        %v1790 = vsel %vm683, %v1788, %v1789
        %v1791 = vrot.slane %v1690, 2
        %v1792 = vsel %vm683, %v1789, %v1791
        %v1793 = vrot.slane %v1691, 2
        %v1794 = vrot.slane %v1692, 2
        %v1795 = vsel %vm683, %v1793, %v1794
        %v1796 = vrot.slane %v1693, 2
        %v1797 = vsel %vm683, %v1794, %v1796
        %v1798 = vrot.slane %v1694, 2
        %v1799 = vrot.slane %v1695, 2
        %v1800 = vsel %vm683, %v1798, %v1799
        %v1801 = vrot.slane %v1696, 2
        %v1802 = vsel %vm683, %v1799, %v1801
        %v1803 = vrot.slane %v1697, 2
        %v1804 = vrot.slane %v1698, 2
        %v1805 = vsel %vm683, %v1803, %v1804
        %v1806 = vrot.slane %v1699, 2
        %v1807 = vsel %vm683, %v1804, %v1806
        %v1808 = vrot.slane %v1700, 2
        %v1809 = vrot.slane %v1701, 2
        %v1810 = vsel %vm683, %v1808, %v1809
        %v1811 = vrot.slane %v1702, 2
        %v1812 = vsel %vm683, %v1809, %v1811
        %v1813 = vrot.slane %v1703, 2
        %v1814 = vrot.slane %v1704, 2
        %v1815 = vsel %vm683, %v1813, %v1814
        %v1816 = vrot.slane %v1705, 2
        %v1817 = vsel %vm683, %v1814, %v1816
        %v1818 = vrot.slane %v1706, 2
        %v1819 = vrot.slane %v1707, 2
        %v1820 = vsel %vm683, %v1818, %v1819
        %v1821 = vrot.slane %v1708, 2
        %v1822 = vsel %vm683, %v1819, %v1821
        %v1823 = vrot.slane %v1709, 2
        %v1824 = vrot.slane %v1710, 2
        %v1825 = vsel %vm683, %v1823, %v1824
        %v1826 = vrot.slane %v1711, 2
        %v1827 = vsel %vm683, %v1824, %v1826
        %v1828 = vrot.slane %v1712, 2
        %v1829 = vrot.slane %v1713, 2
        %v1830 = vsel %vm683, %v1828, %v1829
        %v1831 = vrot.slane %v1714, 2
        %v1832 = vsel %vm683, %v1829, %v1831
        %v1833 = vrot.slane %v1715, 2
        %v1834 = vrot.slane %v1716, 2
        %v1835 = vsel %vm683, %v1833, %v1834
        %v1836 = vrot.slane %v1717, 2
        %v1837 = vsel %vm683, %v1834, %v1836
        %v1838 = vrot.slane %v1718, 2
        %v1839 = vrot.slane %v1719, 2
        %v1840 = vsel %vm683, %v1838, %v1839
        %v1841 = vrot.slane %v1720, 2
        %v1842 = vsel %vm683, %v1839, %v1841
        %v1843 = vrot.slane %v1721, 2
        %v1844 = vrot.slane %v1722, 2
        %v1845 = vsel %vm683, %v1843, %v1844
        %v1846 = vrot.slane %v1723, 2
        %v1847 = vsel %vm683, %v1844, %v1846
        %v1848 = vrot.slane %v1724, 2
        %v1849 = vrot.slane %v1725, 2
        %v1850 = vsel %vm683, %v1848, %v1849
        %v1851 = vrot.slane %v1726, 2
        %v1852 = vsel %vm683, %v1849, %v1851
        %v1853 = vrot.slane %v1727, 2
        %v1854 = vrot.slane %v1728, 2
        %v1855 = vsel %vm683, %v1853, %v1854
        %v1856 = vrot.slane %v1729, 2
        %v1857 = vsel %vm683, %v1854, %v1856
        %v1890 = vadd.f32 %v1649, %v1780
        %v1891 = vadd.f32 %v1650, %v1782
        %v1892 = vadd.f32 %v1651, %v1785
        %v1893 = vadd.f32 %v1652, %v1787
        %v1894 = vadd.f32 %v1653, %v1790
        %v1895 = vadd.f32 %v1654, %v1792
        %v1896 = vadd.f32 %v1655, %v1795
        %v1897 = vadd.f32 %v1656, %v1797
        %v1898 = vadd.f32 %v1657, %v1800
        %v1899 = vadd.f32 %v1658, %v1802
        %v1900 = vadd.f32 %v1659, %v1805
        %v1901 = vadd.f32 %v1660, %v1807
        %v1902 = vadd.f32 %v1661, %v1810
        %v1903 = vadd.f32 %v1662, %v1812
        %v1904 = vadd.f32 %v1663, %v1815
        %v1905 = vadd.f32 %v1664, %v1817
        %v1906 = vadd.f32 %v1665, %v1820
        %v1907 = vadd.f32 %v1666, %v1822
        %v1908 = vadd.f32 %v1667, %v1825
        %v1909 = vadd.f32 %v1668, %v1827
        %v1910 = vadd.f32 %v1669, %v1830
        %v1911 = vadd.f32 %v1670, %v1832
        %v1912 = vadd.f32 %v1671, %v1835
        %v1913 = vadd.f32 %v1672, %v1837
        %v1914 = vadd.f32 %v1673, %v1840
        %v1915 = vadd.f32 %v1674, %v1842
        %v1916 = vadd.f32 %v1675, %v1845
        %v1917 = vadd.f32 %v1676, %v1847
        %v1918 = vadd.f32 %v1677, %v1850
        %v1919 = vadd.f32 %v1678, %v1852
        %v1920 = vadd.f32 %v1679, %v1855
        %v1921 = vadd.f32 %v1680, %v1857
        %1922 = vmatpush.msra.mxu0 %v278
        %1923 = vmatpush.msra.mxu0 %v277
        %1924 = vmatpush.msra.mxu0 %v276
        %1925 = vmatpush.msra.mxu0 %v275
        %1926 = vmatpush.msra.mxu0 %v274
        %1927 = vmatpush.msra.mxu0 %v273
        %1928 = vmatpush.msra.mxu0 %v272
        %1929 = vmatpush.msra.mxu0 %v271
        %1930 = vmatpush.msra.mxu0 %v270
        %1931 = vmatpush.msra.mxu0 %v269
        %1932 = vmatpush.msra.mxu0 %v268
        %1933 = vmatpush.msra.mxu0 %v267
        %1934 = vmatpush.msra.mxu0 %v266
        %1935 = vmatpush.msra.mxu0 %v265
        %1936 = vmatpush.msra.mxu0 %v264
        %1937 = vmatpush.msra.mxu0 %v263
        %1938 = vmatmul.f32.gmra.mxu0 %v1890
        %v1939 = vpop.f32.mrf.mxu0
        %v1940 = vadd.f32 0.0, %v1939
        %1941 = vmatmul.f32.gmra.mxu0 %v1891
        %v1942 = vpop.f32.mrf.mxu0
        %v1943 = vadd.f32 0.0, %v1942
        %1944 = vmatmul.f32.gmra.mxu0 %v1892
        %v1945 = vpop.f32.mrf.mxu0
        %v1946 = vadd.f32 0.0, %v1945
        %1947 = vmatmul.f32.gmra.mxu0 %v1893
        %v1948 = vpop.f32.mrf.mxu0
        %v1949 = vadd.f32 0.0, %v1948
        %1950 = vmatmul.f32.gmra.mxu0 %v1894
        %v1951 = vpop.f32.mrf.mxu0
        %v1952 = vadd.f32 0.0, %v1951
        %1953 = vmatmul.f32.gmra.mxu0 %v1895
        %v1954 = vpop.f32.mrf.mxu0
        %v1955 = vadd.f32 0.0, %v1954
        %1956 = vmatmul.f32.gmra.mxu0 %v1896
        %v1957 = vpop.f32.mrf.mxu0
        %v1958 = vadd.f32 0.0, %v1957
        %1959 = vmatmul.f32.gmra.mxu0 %v1897
        %v1960 = vpop.f32.mrf.mxu0
        %v1961 = vadd.f32 0.0, %v1960
        %1962 = vmatmul.f32.gmra.mxu0 %v1898
        %v1963 = vpop.f32.mrf.mxu0
        %v1964 = vadd.f32 0.0, %v1963
        %1965 = vmatmul.f32.gmra.mxu0 %v1899
        %v1966 = vpop.f32.mrf.mxu0
        %v1967 = vadd.f32 0.0, %v1966
        %1968 = vmatmul.f32.gmra.mxu0 %v1900
        %v1969 = vpop.f32.mrf.mxu0
        %v1970 = vadd.f32 0.0, %v1969
        %1971 = vmatmul.f32.gmra.mxu0 %v1901
        %v1972 = vpop.f32.mrf.mxu0
        %v1973 = vadd.f32 0.0, %v1972
        %1974 = vmatmul.f32.gmra.mxu0 %v1902
        %v1975 = vpop.f32.mrf.mxu0
        %v1976 = vadd.f32 0.0, %v1975
        %1977 = vmatmul.f32.gmra.mxu0 %v1903
        %v1978 = vpop.f32.mrf.mxu0
        %v1979 = vadd.f32 0.0, %v1978
        %1980 = vmatmul.f32.gmra.mxu0 %v1904
        %v1981 = vpop.f32.mrf.mxu0
        %v1982 = vadd.f32 0.0, %v1981
        %1983 = vmatmul.f32.gmra.mxu0 %v1905
        %v1984 = vpop.f32.mrf.mxu0
        %v1985 = vadd.f32 0.0, %v1984
        %1986 = vmatmul.f32.gmra.mxu0 %v1906
        %v1987 = vpop.f32.mrf.mxu0
        %v1988 = vadd.f32 0.0, %v1987
        %1989 = vmatmul.f32.gmra.mxu0 %v1907
        %v1990 = vpop.f32.mrf.mxu0
        %v1991 = vadd.f32 0.0, %v1990
        %1992 = vmatmul.f32.gmra.mxu0 %v1908
        %v1993 = vpop.f32.mrf.mxu0
        %v1994 = vadd.f32 0.0, %v1993
        %1995 = vmatmul.f32.gmra.mxu0 %v1909
        %v1996 = vpop.f32.mrf.mxu0
        %v1997 = vadd.f32 0.0, %v1996
        %1998 = vmatmul.f32.gmra.mxu0 %v1910
        %v1999 = vpop.f32.mrf.mxu0
        %v2000 = vadd.f32 0.0, %v1999
        %2001 = vmatmul.f32.gmra.mxu0 %v1911
        %v2002 = vpop.f32.mrf.mxu0
        %v2003 = vadd.f32 0.0, %v2002
        %2004 = vmatmul.f32.gmra.mxu0 %v1912
        %v2005 = vpop.f32.mrf.mxu0
        %v2006 = vadd.f32 0.0, %v2005
        %2007 = vmatmul.f32.gmra.mxu0 %v1913
        %v2008 = vpop.f32.mrf.mxu0
        %v2009 = vadd.f32 0.0, %v2008
        %2010 = vmatmul.f32.gmra.mxu0 %v1914
        %v2011 = vpop.f32.mrf.mxu0
        %v2012 = vadd.f32 0.0, %v2011
        %2013 = vmatmul.f32.gmra.mxu0 %v1915
        %v2014 = vpop.f32.mrf.mxu0
        %v2015 = vadd.f32 0.0, %v2014
        %2016 = vmatmul.f32.gmra.mxu0 %v1916
        %v2017 = vpop.f32.mrf.mxu0
        %v2018 = vadd.f32 0.0, %v2017
        %2019 = vmatmul.f32.gmra.mxu0 %v1917
        %v2020 = vpop.f32.mrf.mxu0
        %v2021 = vadd.f32 0.0, %v2020
        %2022 = vmatmul.f32.gmra.mxu0 %v1918
        %v2023 = vpop.f32.mrf.mxu0
        %v2024 = vadd.f32 0.0, %v2023
        %2025 = vmatmul.f32.gmra.mxu0 %v1919
        %v2026 = vpop.f32.mrf.mxu0
        %v2027 = vadd.f32 0.0, %v2026
        %2028 = vmatmul.f32.gmra.mxu0 %v1920
        %v2029 = vpop.f32.mrf.mxu0
        %v2030 = vadd.f32 0.0, %v2029
        %2031 = vmatmul.f32.gmra.mxu0 %v1921
        %v2032 = vpop.f32.mrf.mxu0
        %v2033 = vadd.f32 0.0, %v2032
        %2034 = vdwg.mxu0
        %v2035 = vadd.f32 %v1940, %v1943
        %v2036 = vadd.f32 %v2035, %v1946
        %v2037 = vadd.f32 %v2036, %v1949
        %v2038 = vadd.f32 %v2037, %v1952
        %v2039 = vadd.f32 %v2038, %v1955
        %v2040 = vadd.f32 %v2039, %v1958
        %v2041 = vadd.f32 %v2040, %v1961
        %v2042 = vadd.f32 %v2041, %v1964
        %v2043 = vadd.f32 %v2042, %v1967
        %v2044 = vadd.f32 %v2043, %v1970
        %v2045 = vadd.f32 %v2044, %v1973
        %v2046 = vadd.f32 %v2045, %v1976
        %v2047 = vadd.f32 %v2046, %v1979
        %v2048 = vadd.f32 %v2047, %v1982
        %v2049 = vadd.f32 %v2048, %v1985
        %v2050 = vadd.f32 %v2049, %v1988
        %v2051 = vadd.f32 %v2050, %v1991
        %v2052 = vadd.f32 %v2051, %v1994
        %v2053 = vadd.f32 %v2052, %v1997
        %v2054 = vadd.f32 %v2053, %v2000
        %v2055 = vadd.f32 %v2054, %v2003
        %v2056 = vadd.f32 %v2055, %v2006
        %v2057 = vadd.f32 %v2056, %v2009
        %v2058 = vadd.f32 %v2057, %v2012
        %v2059 = vadd.f32 %v2058, %v2015
        %v2060 = vadd.f32 %v2059, %v2018
        %v2061 = vadd.f32 %v2060, %v2021
        %v2062 = vadd.f32 %v2061, %v2024
        %v2063 = vadd.f32 %v2062, %v2027
        %v2064 = vadd.f32 %v2063, %v2030
        %v2065 = vadd.f32 %v2064, %v2033
        %v2066 = vrot.slane %v2065, 4
        %v2067 = vadd.f32 %v2065, %v2066
        %v2068 = vrot.slane %v2067, 2
        %v2069 = vadd.f32 %v2067, %v2068
        %v2070 = vrot.slane %v2069, 1
        %v2071 = vadd.f32 %v2069, %v2070
        %v2072 = vmul.f32 %v1940, %v1940
        %v2073 = vmul.f32 %v1943, %v1943
        %v2074 = vmul.f32 %v1946, %v1946
        %v2075 = vmul.f32 %v1949, %v1949
        %v2076 = vmul.f32 %v1952, %v1952
        %v2077 = vmul.f32 %v1955, %v1955
        %v2078 = vmul.f32 %v1958, %v1958
        %v2079 = vmul.f32 %v1961, %v1961
        %v2080 = vmul.f32 %v1964, %v1964
        %v2081 = vmul.f32 %v1967, %v1967
        %v2082 = vmul.f32 %v1970, %v1970
        %v2083 = vmul.f32 %v1973, %v1973
        %v2084 = vmul.f32 %v1976, %v1976
        %v2085 = vmul.f32 %v1979, %v1979
        %v2086 = vmul.f32 %v1982, %v1982
        %v2087 = vmul.f32 %v1985, %v1985
        %v2088 = vmul.f32 %v1988, %v1988
        %v2089 = vmul.f32 %v1991, %v1991
        %v2090 = vmul.f32 %v1994, %v1994
        %v2091 = vmul.f32 %v1997, %v1997
        %v2092 = vmul.f32 %v2000, %v2000
        %v2093 = vmul.f32 %v2003, %v2003
        %v2094 = vmul.f32 %v2006, %v2006
        %v2095 = vmul.f32 %v2009, %v2009
        %v2096 = vmul.f32 %v2012, %v2012
        %v2097 = vmul.f32 %v2015, %v2015
        %v2098 = vmul.f32 %v2018, %v2018
        %v2099 = vmul.f32 %v2021, %v2021
        %v2100 = vmul.f32 %v2024, %v2024
        %v2101 = vmul.f32 %v2027, %v2027
        %v2102 = vmul.f32 %v2030, %v2030
        %v2103 = vmul.f32 %v2033, %v2033
        %v2104 = vadd.f32 %v2072, %v2073
        %v2105 = vadd.f32 %v2104, %v2074
        %v2106 = vadd.f32 %v2105, %v2075
        %v2107 = vadd.f32 %v2106, %v2076
        %v2108 = vadd.f32 %v2107, %v2077
        %v2109 = vadd.f32 %v2108, %v2078
        %v2110 = vadd.f32 %v2109, %v2079
        %v2111 = vadd.f32 %v2110, %v2080
        %v2112 = vadd.f32 %v2111, %v2081
        %v2113 = vadd.f32 %v2112, %v2082
        %v2114 = vadd.f32 %v2113, %v2083
        %v2115 = vadd.f32 %v2114, %v2084
        %v2116 = vadd.f32 %v2115, %v2085
        %v2117 = vadd.f32 %v2116, %v2086
        %v2118 = vadd.f32 %v2117, %v2087
        %v2119 = vadd.f32 %v2118, %v2088
        %v2120 = vadd.f32 %v2119, %v2089
        %v2121 = vadd.f32 %v2120, %v2090
        %v2122 = vadd.f32 %v2121, %v2091
        %v2123 = vadd.f32 %v2122, %v2092
        %v2124 = vadd.f32 %v2123, %v2093
        %v2125 = vadd.f32 %v2124, %v2094
        %v2126 = vadd.f32 %v2125, %v2095
        %v2127 = vadd.f32 %v2126, %v2096
        %v2128 = vadd.f32 %v2127, %v2097
        %v2129 = vadd.f32 %v2128, %v2098
        %v2130 = vadd.f32 %v2129, %v2099
        %v2131 = vadd.f32 %v2130, %v2100
        %v2132 = vadd.f32 %v2131, %v2101
        %v2133 = vadd.f32 %v2132, %v2102
        %v2134 = vadd.f32 %v2133, %v2103
        %v2135 = vrot.slane %v2134, 4
        %v2136 = vadd.f32 %v2134, %v2135
        %v2137 = vrot.slane %v2136, 2
        %v2138 = vadd.f32 %v2136, %v2137
        %v2139 = vrot.slane %v2138, 1
        %v2140 = vadd.f32 %v2138, %v2139
        %2141 = vst [vmem:[%s194] sm:$0xff] %v1940
        %2142 = vst [vmem:[%s194 + $0x8] sm:$0xff] %v1943
        %2143 = vst [vmem:[%s194 + $0x10] sm:$0xff] %v1946
        %2144 = vst [vmem:[%s194 + $0x18] sm:$0xff] %v1949
        %2145 = vst [vmem:[%s194 + $0x20] sm:$0xff] %v1952
        %2146 = vst [vmem:[%s194 + $0x28] sm:$0xff] %v1955
        %2147 = vst [vmem:[%s194 + $0x30] sm:$0xff] %v1958
        %2148 = vst [vmem:[%s194 + $0x38] sm:$0xff] %v1961
        %2149 = vst [vmem:[%s194 + $0x40] sm:$0xff] %v1964
        %2150 = vst [vmem:[%s194 + $0x48] sm:$0xff] %v1967
        %2151 = vst [vmem:[%s194 + $0x50] sm:$0xff] %v1970
        %2152 = vst [vmem:[%s194 + $0x58] sm:$0xff] %v1973
        %2153 = vst [vmem:[%s194 + $0x60] sm:$0xff] %v1976
        %2154 = vst [vmem:[%s194 + $0x68] sm:$0xff] %v1979
        %2155 = vst [vmem:[%s194 + $0x70] sm:$0xff] %v1982
        %2156 = vst [vmem:[%s194 + $0x78] sm:$0xff] %v1985
        %2157 = vst [vmem:[%s194 + $0x80] sm:$0xff] %v1988
        %2158 = vst [vmem:[%s194 + $0x88] sm:$0xff] %v1991
        %2159 = vst [vmem:[%s194 + $0x90] sm:$0xff] %v1994
        %2160 = vst [vmem:[%s194 + $0x98] sm:$0xff] %v1997
        %2161 = vst [vmem:[%s194 + $0xa0] sm:$0xff] %v2000
        %2162 = vst [vmem:[%s194 + $0xa8] sm:$0xff] %v2003
        %2163 = vst [vmem:[%s194 + $0xb0] sm:$0xff] %v2006
        %2164 = vst [vmem:[%s194 + $0xb8] sm:$0xff] %v2009
        %2165 = vst [vmem:[%s194 + $0xc0] sm:$0xff] %v2012
        %2166 = vst [vmem:[%s194 + $0xc8] sm:$0xff] %v2015
        %2167 = vst [vmem:[%s194 + $0xd0] sm:$0xff] %v2018
        %2168 = vst [vmem:[%s194 + $0xd8] sm:$0xff] %v2021
        %2169 = vst [vmem:[%s194 + $0xe0] sm:$0xff] %v2024
        %2170 = vst [vmem:[%s194 + $0xe8] sm:$0xff] %v2027
        %2171 = vst [vmem:[%s194 + $0xf0] sm:$0xff] %v2030
        %2172 = vst [vmem:[%s194 + $0xf8] sm:$0xff] %v2033
        %vm2173 = vcmask 1040384
        %v2174 = vsel %vm2173, %v2071, %v2140
        %2175 = vst [vmem:[%s201] sm:$0x3] %v2174
        %s2176 = sand.u32 %s98, 1
        %s2177 = scalar_lea.sflag [#allocation3], %s2176
        %s2178 = sand.u32 %s98, 1
        %s2179 = smul.addr %s2178, 256
        %s2180 = scalar_lea.vmem [#allocation2], %s2179
        %s2181 = sand.u32 %s124, 1
        %s2182 = scalar_lea.sflag [#allocation5], %s2181
        %s2183 = sand.u32 %s124, 1
        %s2184 = smul.addr %s2183, 2
        %s2185 = scalar_lea.vmem [#allocation4], %s2184
        // Predicated region
        $region33: #{tpu_custom_call.1} parent=31 // pred_check
          %p2186 = pneg %p108
        $region34: #{tpu_custom_call.1} parent=31 // pred_check_branch
          %2188 = sbr.rel (%p2186) target = $region36
        $region35: #{tpu_custom_call.1} parent=31 // pred_region
          %2190 = vsyncadd %s2177, 0
          %s2191 = smul.addr %s22, 32
          %s2192 = smul.addr %s2191, 8
          %s2193 = scalar_lea.hbm %s3, %s2192
          %s2194 = sshll.u32 %s2180, 4
          %s2195 = int_to_ptr.vmem [resolvable:$true] %s2194
          %s2196 = sshll.u32 %s2193, 4
          %s2197 = int_to_ptr.hbm [resolvable:$true] %s2196
          %2202 = dma.vmem_to_hbm [thread:$0]  %s2195, 4096, %s2197, %s2177, 128, 128, 8
        $region36: #{tpu_custom_call.1} parent=31 // pred_fallthru
          _
        // Predicated region
        $region37: #{tpu_custom_call.1} parent=31 // pred_check
          %p2203 = pneg %p134
        $region38: #{tpu_custom_call.1} parent=31 // pred_check_branch
          %2205 = sbr.rel (%p2203) target = $region40
        $region39: #{tpu_custom_call.1} parent=31 // pred_region
          %2207 = vsyncadd %s2182, 0
          %s2208 = smul.addr %s22, 2
          %s2209 = scalar_lea.hbm %s4, %s2208
          %s2211 = sshll.u32 %s2185, 4
          %s2212 = int_to_ptr.vmem [resolvable:$true] %s2211
          %s2213 = sshll.u32 %s2209, 4
          %s2214 = int_to_ptr.hbm [resolvable:$true] %s2213
          %2216 = dma.vmem_to_hbm [thread:$0]  %s2212, 32, %s2214, %s2182
        $region40: #{tpu_custom_call.1} parent=31 // pred_fallthru
          _
      $region32: #{tpu_custom_call.1} parent=5 // pred_fallthru
        _
      %p2217 = scmp.le.s32.totalorder 2, %s17
      // Predicated region
      $region41: #{tpu_custom_call.1} parent=5 // pred_check
        %p2218 = pneg %p2217
      $region42: #{tpu_custom_call.1} parent=5 // pred_check_branch
        %2220 = sbr.rel (%p2218) target = $region44
      $region43: #{tpu_custom_call.1} parent=5 // pred_region
        %s2221 = ssub.s32 %s17, 2
        // Predicated region
        $region45: #{tpu_custom_call.1} parent=43 // pred_check
          %p2222 = pneg %p114
        $region46: #{tpu_custom_call.1} parent=43 // pred_check_branch
          %2224 = sbr.rel (%p2222) target = $region48
        $region47: #{tpu_custom_call.1} parent=43 // pred_region
          %s2225 = sand.u32 %s99, 1
          %s2226 = scalar_lea.sflag [#allocation3], %s2225
          %s2227 = sand.u32 %s99, 1
          %s2228 = smul.addr %s2227, 256
          %s2229 = scalar_lea.vmem [#allocation2], %s2228
          %2231 = dma.done %s2226, 4096
        $region48: #{tpu_custom_call.1} parent=43 // pred_fallthru
          _
        // Predicated region
        $region49: #{tpu_custom_call.1} parent=43 // pred_check
          %p2232 = pneg %p140
        $region50: #{tpu_custom_call.1} parent=43 // pred_check_branch
          %2234 = sbr.rel (%p2232) target = $region52
        $region51: #{tpu_custom_call.1} parent=43 // pred_region
          %s2235 = sand.u32 %s125, 1
          %s2236 = scalar_lea.sflag [#allocation5], %s2235
          %s2237 = sand.u32 %s125, 1
          %s2238 = smul.addr %s2237, 2
          %s2239 = scalar_lea.vmem [#allocation4], %s2238
          %2241 = dma.done %s2236, 32
        $region52: #{tpu_custom_call.1} parent=43 // pred_fallthru
          _
      $region44: #{tpu_custom_call.1} parent=5 // pred_fallthru
        _
    $region6: #{tpu_custom_call.1} parent=1 // loop_footer
      %s21 = sadd.s32 1, %s17
    $region7: #{tpu_custom_call.1} parent=1 // loop_footer_branch
      %16 = sbr.rel target = $region3
    $region8: #{tpu_custom_call.1} parent=1 // loop_exit
      _
    %2242 = vsyncpa [#allocation3], 1
    %s2243 = scalar_lea.sflag [#allocation3], 1
    %2244 = vsyncpa %s2243, 1
    %2245 = vsyncpa [#allocation5], 1
    %s2246 = scalar_lea.sflag [#allocation5], 1
    %2247 = vsyncpa %s2246, 1

</llo_original>
